<compile_context>
chip_gen: v6e
topology: v6e:2x2x1
jax: 0.10.0
libtpu: 0.0.40
codegen_flags: <defaults>
</compile_context>

<pallas_src>
import functools

import jax
import jax.numpy as jnp
import numpy as np
from jax.experimental import pallas as pl
from jax.experimental.pallas import tpu as pltpu


def _round_up(x, m):
    return (x + m - 1) // m * m


def _round_down(x, m):
    return (x // m) * m


def _mutual_info_partials_kernel(
    e_ref, f_ref, g_ref,                               # inputs: (B, TD) tiles
    ef_ref, eg_ref, fg_ref, se_ref, sf_ref, sg_ref,    # outputs: per-split partials
    *, d, td, sub, n_sub, tiles_per_split, mask_needed):
    """Accumulates unnormalized Grams + squared row norms over the D tiles of
    one split.  Outputs are f32 accumulators resident in VMEM across the
    'arbitrary' k axis (written back when the split index changes)."""
    c = pl.program_id(0)          # split index ("parallel": dual-core on v7x)
    k = pl.program_id(1)          # D-tile index within the split ("arbitrary")

    # ---- init this split's accumulators on its first D tile ------------------
    @pl.when(k == 0)
    def _():
        ef_ref[...] = jnp.zeros_like(ef_ref)
        eg_ref[...] = jnp.zeros_like(eg_ref)
        fg_ref[...] = jnp.zeros_like(fg_ref)
        se_ref[...] = jnp.zeros_like(se_ref)
        sf_ref[...] = jnp.zeros_like(sf_ref)
        sg_ref[...] = jnp.zeros_like(sg_ref)

    # Nominal global column of this tile's first lane (may exceed d for the
    # ragged / phantom tail tiles; those columns are masked to zero below).
    tile_base = (c * tiles_per_split + k) * td

    def accum(e, f, g, off):
        if mask_needed:
            col = jax.lax.broadcasted_iota(jnp.int32, (1, e.shape[1]), 1)
            valid = col < (d - (tile_base + off))
            zero = jnp.array(0, e.dtype)
            e = jnp.where(valid, e, zero)
            f = jnp.where(valid, f, zero)
            g = jnp.where(valid, g, zero)
        # x @ y.T on the MXU, contracting the lane (D) axis of both operands;
        # f32 accumulation regardless of the streaming dtype.
        dn = (((1,), (1,)), ((), ()))
        ef_ref[...] += jax.lax.dot_general(e, f, dn, preferred_element_type=jnp.float32)
        eg_ref[...] += jax.lax.dot_general(e, g, dn, preferred_element_type=jnp.float32)
        fg_ref[...] += jax.lax.dot_general(f, g, dn, preferred_element_type=jnp.float32)
        # deferred L2 normalization: accumulate per-row sum of squares in f32
        ef32 = e.astype(jnp.float32)
        ff32 = f.astype(jnp.float32)
        gf32 = g.astype(jnp.float32)
        se_ref[...] += jnp.sum(ef32 * ef32, axis=1, keepdims=True)
        sf_ref[...] += jnp.sum(ff32 * ff32, axis=1, keepdims=True)
        sg_ref[...] += jnp.sum(gf32 * gf32, axis=1, keepdims=True)

    # TODO(synk): a stacked (3B, D) X @ X^T variant would fuse the three DMA
    # streams / MXU pushes and read the norms off the self-block diagonals, at
    # the cost of an extra HBM pass to stack separate inputs in the wrapper.
    if n_sub == 1:
        accum(e_ref[...], f_ref[...], g_ref[...], 0)
    else:
        # Large D tile: walk it in `sub`-lane chunks to bound vreg live ranges.
        def body(s, carry):
            off = pl.multiple_of(s * sub, sub)
            sl = pl.ds(off, sub)
            accum(e_ref[:, sl], f_ref[:, sl], g_ref[:, sl], off)
            return carry
        jax.lax.fori_loop(0, n_sub, body, 0, unroll=n_sub <= 8)


def improved_mutual_info_loss(event, frame, eframe, *, temperature=1.0,
                              negative_weight=0.5, reduction="mean",
                              stream_dtype=None, max_tile_cols=None):
    """JAX/Pallas equivalent of ImprovedMutualInfoLoss.forward.

    1.0*MI(event, frame) + 0.5*MI(event, eframe) + 0.5*MI(frame, eframe),
    each MI = reduce(diag(sim) - negative_weight * logsumexp(offdiag(sim))).

    Notes:
      * Requires batch >= 2 (off-diagonal logsumexp is empty otherwise).
      * The kernel is HBM-streaming bound; pass activations that are already
        bf16 (or set stream_dtype=jnp.bfloat16) to halve HBM traffic.  Gram and
        norm accumulation is always f32.
      * `max_tile_cols` optionally caps the D-tile width (mainly for testing
        the multi-tile / dual-split paths on small inputs).
    """
    if reduction not in ("mean", "sum"):
        raise ValueError("reduction must be 'mean' or 'sum'")
    bsz = event.shape[0]
    if bsz < 2:
        raise ValueError("batch size must be >= 2 for the contrastive MI loss")

    e = event.reshape(bsz, -1)
    f = frame.reshape(bsz, -1)
    g = eframe.reshape(bsz, -1)
    if stream_dtype is not None and e.dtype != jnp.dtype(stream_dtype):
        # Casting here costs one extra HBM pass over the inputs; the full 2x
        # win comes from feeding activations that are already bf16.
        e = e.astype(stream_dtype)
        f = f.astype(stream_dtype)
        g = g.astype(stream_dtype)
    d = e.shape[1]
    itemsize = jnp.dtype(e.dtype).itemsize
    b_pad = _round_up(bsz, 8)

    # ---- generation-aware VMEM budget: v7x 64 MiB -> ~48, v5e/v6e 128 -> ~96 -
    try:
        vmem_cap = int(pltpu.get_tpu_info().vmem_capacity_bytes)
    except Exception:  # detection unavailable -> conservative (v7x-sized) cap
        vmem_cap = 64 << 20
    budget = min((vmem_cap * 3) // 4, 100 << 20)

    # ---- inner sub-chunk width: keep ~<=96 KiB of raw operands live in vregs -
    sub = min(2048, max(128, _round_down((96 * 1024) // (3 * b_pad * itemsize), 128)))

    # ---- D tile width: as big as the double-buffered input budget allows so
    # each grid step moves multiple MiB of HBM traffic (per-step overhead
    # ~0.35us otherwise dominates for small B). -------------------------------
    out_bytes = 2 * 3 * b_pad * (_round_up(bsz, 128) + 128) * 4  # dbl-buffered out blocks
    headroom = 4 << 20
    if d <= sub:
        td = d            # single full-width block (legal even if d % 128 != 0)
        sub = d
    else:
        per_col = 3 * 2 * b_pad * itemsize        # 3 inputs, double-buffered
        td_cap = max(sub, _round_down((budget - out_bytes - headroom) // per_col, sub))
        td = min(td_cap, _round_up(d, sub))
        if max_tile_cols is not None:
            td = min(td, max(sub, _round_down(max_tile_cols, sub)))
    n_sub = max(1, td // sub)

    num_tiles = -(-d // td)
    # Split the D reduction over a leading "parallel" axis: on v7x the two
    # TensorCores each stream half of D; on v5e/v6e (1 TC) it is a no-op loop.
    n_splits = 2 if num_tiles >= 2 else 1
    tiles_per_split = -(-num_tiles // n_splits)
    coverage = n_splits * tiles_per_split * td
    mask_needed = coverage != d                       # ragged tail and/or phantom tile
    need_clamp = (n_splits * tiles_per_split) > num_tiles

    if need_clamp:
        # Phantom tail tile of the second split: clamp its DMA to the last real
        # block (its contribution is fully masked to zero in the kernel).
        def in_idx(c, k):
            return (0, jnp.minimum(c * tiles_per_split + k, num_tiles - 1))
    else:
        def in_idx(c, k):
            return (0, c * tiles_per_split + k)

    in_spec = pl.BlockSpec((bsz, td), in_idx)
    gram_spec = pl.BlockSpec((None, bsz, bsz), lambda c, k: (c, 0, 0))
    sq_spec = pl.BlockSpec((None, bsz, 1), lambda c, k: (c, 0, 0))

    kernel = functools.partial(
        _mutual_info_partials_kernel,
        d=d, td=td, sub=sub, n_sub=n_sub,
        tiles_per_split=tiles_per_split, mask_needed=bool(mask_needed))

    out_shapes = (
        [jax.ShapeDtypeStruct((n_splits, bsz, bsz), jnp.float32)] * 3
        + [jax.ShapeDtypeStruct((n_splits, bsz, 1), jnp.float32)] * 3)

    partials = pl.pallas_call(
        kernel,
        out_shape=out_shapes,
        grid_spec=pltpu.PrefetchScalarGridSpec(
            num_scalar_prefetch=0,
            grid=(n_splits, tiles_per_split),
            in_specs=[in_spec, in_spec, in_spec],
            out_specs=[gram_spec, gram_spec, gram_spec, sq_spec, sq_spec, sq_spec],
        ),
        compiler_params=pltpu.CompilerParams(
            dimension_semantics=("parallel", "arbitrary"),
            vmem_limit_bytes=int(budget),
        ),
    )(e, f, g)

    # ---- tiny (B, B) epilogue in plain JAX (also combines the dual-core
    # partials); cost is negligible vs streaming the (B, D) inputs. -----------
    gram_ef, gram_eg, gram_fg, sq_e, sq_f, sq_g = [p.sum(axis=0) for p in partials]

    # F.normalize(p=2, dim=1) semantics: x / max(||x||, 1e-12); the clamp is
    # applied to the norms before scaling the Gram.
    ne = jnp.maximum(jnp.sqrt(sq_e), 1e-12)   # (B, 1)
    nf = jnp.maximum(jnp.sqrt(sq_f), 1e-12)   # (B, 1)
    ng = jnp.maximum(jnp.sqrt(sq_g), 1e-12)   # (B, 1)
    eye = jnp.eye(bsz, dtype=bool)

    def pair_mi(gram, nx, ny):
        sim = gram / (nx * ny.T * temperature)
        pos = jnp.diagonal(sim)
        neg = jnp.where(eye, -jnp.inf, sim)
        lse = jax.scipy.special.logsumexp(neg, axis=1)
        mi = pos - negative_weight * lse
        return jnp.mean(mi) if reduction == "mean" else jnp.sum(mi)

    return (1.0 * pair_mi(gram_ef, ne, nf)
            + 0.5 * pair_mi(gram_eg, ne, ng)
            + 0.5 * pair_mi(gram_fg, nf, ng))


def _reference_loss(event, frame, eframe, temperature=1.0, negative_weight=0.5):
    """Pure-JAX reference mirroring the PyTorch module, for verification."""

    def compute_similarity(x, y):
        bsz = x.shape[0]
        xf = x.reshape(bsz, -1)
        yf = y.reshape(bsz, -1)
        xn = xf / jnp.maximum(jnp.linalg.norm(xf, axis=1, keepdims=True), 1e-12)
        yn = yf / jnp.maximum(jnp.linalg.norm(yf, axis=1, keepdims=True), 1e-12)
        sim = (xn @ yn.T) / temperature
        pos = jnp.diag(sim)
        eye = jnp.eye(bsz, dtype=bool)
        neg = jnp.where(eye, -jnp.inf, sim)
        lse = jax.scipy.special.logsumexp(neg, axis=1)
        return jnp.mean(pos - negative_weight * lse)

    return (1.0 * compute_similarity(event, frame)
            + 0.5 * compute_similarity(event, eframe)
            + 0.5 * compute_similarity(frame, eframe))


if __name__ == "__main__":
    key = jax.random.PRNGKey(0)
    k1, k2, k3 = jax.random.split(key, 3)

    # Small NCHW shapes consistent with the module.
    B, C, H, W = 2, 4, 16, 16
    event = jax.random.normal(k1, (B, C, H, W), dtype=jnp.float32)
    frame = jax.random.normal(k2, (B, C, H, W), dtype=jnp.float32)
    eframe = jax.random.normal(k3, (B, C, H, W), dtype=jnp.float32)

    ref = jax.block_until_ready(_reference_loss(event, frame, eframe))

    # 1) f32 streaming, single-tile fast path
    loss = jax.block_until_ready(improved_mutual_info_loss(event, frame, eframe))
    assert np.allclose(np.asarray(loss), np.asarray(ref), rtol=2e-5, atol=2e-5), (
        f"f32 mismatch: pallas={loss} ref={ref}")

    # 2) bf16 streaming (recommended when activations already live in bf16)
    loss_bf16 = jax.block_until_ready(
        improved_mutual_info_loss(event, frame, eframe, stream_dtype=jnp.bfloat16))
    assert np.allclose(np.asarray(loss_bf16), np.asarray(ref), rtol=3e-2, atol=3e-2), (
        f"bf16 mismatch: pallas={loss_bf16} ref={ref}")

    # 3) ragged D (D = 2500, not a multiple of 128): masked multi-chunk path
    B2, C2, H2, W2 = 4, 4, 25, 25
    e2 = jax.random.normal(k1, (B2, C2, H2, W2), dtype=jnp.float32)
    f2 = jax.random.normal(k2, (B2, C2, H2, W2), dtype=jnp.float32)
    g2 = jax.random.normal(k3, (B2, C2, H2, W2), dtype=jnp.float32)
    ref2 = jax.block_until_ready(_reference_loss(e2, f2, g2))
    loss2 = jax.block_until_ready(improved_mutual_info_loss(e2, f2, g2))
    assert np.allclose(np.asarray(loss2), np.asarray(ref2), rtol=2e-5, atol=2e-5), (
        f"ragged mismatch: pallas={loss2} ref={ref2}")

    # 4) force small D tiles: multi-tile grid with the 2-way (v7x dual-core) split
    loss3 = jax.block_until_ready(
        improved_mutual_info_loss(e2, f2, g2, max_tile_cols=1024))
    assert np.allclose(np.asarray(loss3), np.asarray(ref2), rtol=2e-5, atol=2e-5), (
        f"split mismatch: pallas={loss3} ref={ref2}")

    print("KERNEL_OK")
</pallas_src>

<mosaic_0001>
module attributes {stable_mosaic.version = 11 : i64} {
  func.func @_mutual_info_partials_kernel(%arg0: i32, %arg1: i32, %arg2: memref<2x1024xf32, #tpu.memory_space<vmem>>, %arg3: memref<2x1024xf32, #tpu.memory_space<vmem>>, %arg4: memref<2x1024xf32, #tpu.memory_space<vmem>>, %arg5: memref<1x2x2xf32, #tpu.memory_space<vmem>>, %arg6: memref<1x2x2xf32, #tpu.memory_space<vmem>>, %arg7: memref<1x2x2xf32, #tpu.memory_space<vmem>>, %arg8: memref<1x2x1xf32, #tpu.memory_space<vmem>>, %arg9: memref<1x2x1xf32, #tpu.memory_space<vmem>>, %arg10: memref<1x2x1xf32, #tpu.memory_space<vmem>>) attributes {dimension_semantics = [#tpu.dimension_semantics<parallel>, #tpu.dimension_semantics<arbitrary>], iteration_bounds = array<i64: 1, 1>, scalar_prefetch = 0 : i64, scratch_operands = 0 : i64, tpu.core_type = #tpu.core_type<tc>, window_params = [{transform_indices = @transform_0, window_bounds = array<i64: 2, 1024>}, {transform_indices = @transform_1, window_bounds = array<i64: 2, 1024>}, {transform_indices = @transform_2, window_bounds = array<i64: 2, 1024>}, {transform_indices = @transform_3, window_bounds = array<i64: 1, 2, 2>}, {transform_indices = @transform_4, window_bounds = array<i64: 1, 2, 2>}, {transform_indices = @transform_5, window_bounds = array<i64: 1, 2, 2>}, {transform_indices = @transform_6, window_bounds = array<i64: 1, 2, 1>}, {transform_indices = @transform_7, window_bounds = array<i64: 1, 2, 1>}, {transform_indices = @transform_8, window_bounds = array<i64: 1, 2, 1>}]} {
    %c0_i32 = arith.constant 0 : i32
    %0 = arith.cmpi eq, %arg1, %c0_i32 : i32
    %1 = arith.extui %0 : i1 to i32
    %c0_i32_0 = arith.constant 0 : i32
    %2 = arith.cmpi ne, %1, %c0_i32_0 : i32
    scf.if %2 {
      %cst_47 = arith.constant 0.000000e+00 : f32
      %54 = vector.broadcast %cst_47 : f32 to vector<2x2xf32>
      %c0_48 = arith.constant 0 : index
      %c0_49 = arith.constant 0 : index
      %c0_50 = arith.constant 0 : index
      %55 = vector.load %arg5[%c0_48, %c0_49, %c0_50] : memref<1x2x2xf32, #tpu.memory_space<vmem>>, vector<1x2x2xf32>
      %56 = vector.shape_cast %55 : vector<1x2x2xf32> to vector<2x2xf32>
      %57 = vector.shape_cast %54 : vector<2x2xf32> to vector<1x2x2xf32>
      tpu.vector_store %arg5[%c0_48, %c0_49, %c0_50], %57 {strides = array<i32>} : memref<1x2x2xf32, #tpu.memory_space<vmem>>, vector<1x2x2xf32>,
      %cst_51 = arith.constant 0.000000e+00 : f32
      %58 = vector.broadcast %cst_51 : f32 to vector<2x2xf32>
      %c0_52 = arith.constant 0 : index
      %c0_53 = arith.constant 0 : index
      %c0_54 = arith.constant 0 : index
      %59 = vector.load %arg6[%c0_52, %c0_53, %c0_54] : memref<1x2x2xf32, #tpu.memory_space<vmem>>, vector<1x2x2xf32>
      %60 = vector.shape_cast %59 : vector<1x2x2xf32> to vector<2x2xf32>
      %61 = vector.shape_cast %58 : vector<2x2xf32> to vector<1x2x2xf32>
      tpu.vector_store %arg6[%c0_52, %c0_53, %c0_54], %61 {strides = array<i32>} : memref<1x2x2xf32, #tpu.memory_space<vmem>>, vector<1x2x2xf32>,
      %cst_55 = arith.constant 0.000000e+00 : f32
      %62 = vector.broadcast %cst_55 : f32 to vector<2x2xf32>
      %c0_56 = arith.constant 0 : index
      %c0_57 = arith.constant 0 : index
      %c0_58 = arith.constant 0 : index
      %63 = vector.load %arg7[%c0_56, %c0_57, %c0_58] : memref<1x2x2xf32, #tpu.memory_space<vmem>>, vector<1x2x2xf32>
      %64 = vector.shape_cast %63 : vector<1x2x2xf32> to vector<2x2xf32>
      %65 = vector.shape_cast %62 : vector<2x2xf32> to vector<1x2x2xf32>
      tpu.vector_store %arg7[%c0_56, %c0_57, %c0_58], %65 {strides = array<i32>} : memref<1x2x2xf32, #tpu.memory_space<vmem>>, vector<1x2x2xf32>,
      %cst_59 = arith.constant 0.000000e+00 : f32
      %66 = vector.broadcast %cst_59 : f32 to vector<2x1xf32>
      %c0_60 = arith.constant 0 : index
      %c0_61 = arith.constant 0 : index
      %c0_62 = arith.constant 0 : index
      %67 = vector.load %arg8[%c0_60, %c0_61, %c0_62] : memref<1x2x1xf32, #tpu.memory_space<vmem>>, vector<1x2x1xf32>
      %68 = vector.shape_cast %67 : vector<1x2x1xf32> to vector<2x1xf32>
      %69 = vector.shape_cast %66 : vector<2x1xf32> to vector<1x2x1xf32>
      tpu.vector_store %arg8[%c0_60, %c0_61, %c0_62], %69 {strides = array<i32>} : memref<1x2x1xf32, #tpu.memory_space<vmem>>, vector<1x2x1xf32>,
      %cst_63 = arith.constant 0.000000e+00 : f32
      %70 = vector.broadcast %cst_63 : f32 to vector<2x1xf32>
      %c0_64 = arith.constant 0 : index
      %c0_65 = arith.constant 0 : index
      %c0_66 = arith.constant 0 : index
      %71 = vector.load %arg9[%c0_64, %c0_65, %c0_66] : memref<1x2x1xf32, #tpu.memory_space<vmem>>, vector<1x2x1xf32>
      %72 = vector.shape_cast %71 : vector<1x2x1xf32> to vector<2x1xf32>
      %73 = vector.shape_cast %70 : vector<2x1xf32> to vector<1x2x1xf32>
      tpu.vector_store %arg9[%c0_64, %c0_65, %c0_66], %73 {strides = array<i32>} : memref<1x2x1xf32, #tpu.memory_space<vmem>>, vector<1x2x1xf32>,
      %cst_67 = arith.constant 0.000000e+00 : f32
      %74 = vector.broadcast %cst_67 : f32 to vector<2x1xf32>
      %c0_68 = arith.constant 0 : index
      %c0_69 = arith.constant 0 : index
      %c0_70 = arith.constant 0 : index
      %75 = vector.load %arg10[%c0_68, %c0_69, %c0_70] : memref<1x2x1xf32, #tpu.memory_space<vmem>>, vector<1x2x1xf32>
      %76 = vector.shape_cast %75 : vector<1x2x1xf32> to vector<2x1xf32>
      %77 = vector.shape_cast %74 : vector<2x1xf32> to vector<1x2x1xf32>
      tpu.vector_store %arg10[%c0_68, %c0_69, %c0_70], %77 {strides = array<i32>} : memref<1x2x1xf32, #tpu.memory_space<vmem>>, vector<1x2x1xf32>,
    } else {
    }
    %c0 = arith.constant 0 : index
    %c0_1 = arith.constant 0 : index
    %3 = vector.load %arg2[%c0, %c0_1] : memref<2x1024xf32, #tpu.memory_space<vmem>>, vector<2x1024xf32>
    %c0_2 = arith.constant 0 : index
    %c0_3 = arith.constant 0 : index
    %4 = vector.load %arg3[%c0_2, %c0_3] : memref<2x1024xf32, #tpu.memory_space<vmem>>, vector<2x1024xf32>
    %c0_4 = arith.constant 0 : index
    %c0_5 = arith.constant 0 : index
    %5 = vector.load %arg4[%c0_4, %c0_5] : memref<2x1024xf32, #tpu.memory_space<vmem>>, vector<2x1024xf32>
    %c0_6 = arith.constant 0 : index
    %c0_7 = arith.constant 0 : index
    %c0_8 = arith.constant 0 : index
    %6 = vector.load %arg5[%c0_6, %c0_7, %c0_8] : memref<1x2x2xf32, #tpu.memory_space<vmem>>, vector<1x2x2xf32>
    %7 = vector.shape_cast %6 : vector<1x2x2xf32> to vector<2x2xf32>
    %cst = arith.constant dense<0.000000e+00> : vector<2x2xf32>
    %8 = tpu.matmul %3, %4, %cst {dimension_numbers = #tpu.dot_dimension_numbers<[1], [1], [0], [0], [0, 0, 1, 0], [], []>} : vector<2x1024xf32>, vector<2x1024xf32>, vector<2x2xf32> -> vector<2x2xf32>
    %9 = arith.addf %7, %8 : vector<2x2xf32>
    %c0_9 = arith.constant 0 : index
    %c0_10 = arith.constant 0 : index
    %c0_11 = arith.constant 0 : index
    %10 = vector.load %arg5[%c0_9, %c0_10, %c0_11] : memref<1x2x2xf32, #tpu.memory_space<vmem>>, vector<1x2x2xf32>
    %11 = vector.shape_cast %10 : vector<1x2x2xf32> to vector<2x2xf32>
    %12 = vector.shape_cast %9 : vector<2x2xf32> to vector<1x2x2xf32>
    tpu.vector_store %arg5[%c0_9, %c0_10, %c0_11], %12 {strides = array<i32>} : memref<1x2x2xf32, #tpu.memory_space<vmem>>, vector<1x2x2xf32>,
    %c0_12 = arith.constant 0 : index
    %c0_13 = arith.constant 0 : index
    %c0_14 = arith.constant 0 : index
    %13 = vector.load %arg6[%c0_12, %c0_13, %c0_14] : memref<1x2x2xf32, #tpu.memory_space<vmem>>, vector<1x2x2xf32>
    %14 = vector.shape_cast %13 : vector<1x2x2xf32> to vector<2x2xf32>
    %cst_15 = arith.constant dense<0.000000e+00> : vector<2x2xf32>
    %15 = tpu.matmul %3, %5, %cst_15 {dimension_numbers = #tpu.dot_dimension_numbers<[1], [1], [0], [0], [0, 0, 1, 0], [], []>} : vector<2x1024xf32>, vector<2x1024xf32>, vector<2x2xf32> -> vector<2x2xf32>
    %16 = arith.addf %14, %15 : vector<2x2xf32>
    %c0_16 = arith.constant 0 : index
    %c0_17 = arith.constant 0 : index
    %c0_18 = arith.constant 0 : index
    %17 = vector.load %arg6[%c0_16, %c0_17, %c0_18] : memref<1x2x2xf32, #tpu.memory_space<vmem>>, vector<1x2x2xf32>
    %18 = vector.shape_cast %17 : vector<1x2x2xf32> to vector<2x2xf32>
    %19 = vector.shape_cast %16 : vector<2x2xf32> to vector<1x2x2xf32>
    tpu.vector_store %arg6[%c0_16, %c0_17, %c0_18], %19 {strides = array<i32>} : memref<1x2x2xf32, #tpu.memory_space<vmem>>, vector<1x2x2xf32>,
    %c0_19 = arith.constant 0 : index
    %c0_20 = arith.constant 0 : index
    %c0_21 = arith.constant 0 : index
    %20 = vector.load %arg7[%c0_19, %c0_20, %c0_21] : memref<1x2x2xf32, #tpu.memory_space<vmem>>, vector<1x2x2xf32>
    %21 = vector.shape_cast %20 : vector<1x2x2xf32> to vector<2x2xf32>
    %cst_22 = arith.constant dense<0.000000e+00> : vector<2x2xf32>
    %22 = tpu.matmul %4, %5, %cst_22 {dimension_numbers = #tpu.dot_dimension_numbers<[1], [1], [0], [0], [0, 0, 1, 0], [], []>} : vector<2x1024xf32>, vector<2x1024xf32>, vector<2x2xf32> -> vector<2x2xf32>
    %23 = arith.addf %21, %22 : vector<2x2xf32>
    %c0_23 = arith.constant 0 : index
    %c0_24 = arith.constant 0 : index
    %c0_25 = arith.constant 0 : index
    %24 = vector.load %arg7[%c0_23, %c0_24, %c0_25] : memref<1x2x2xf32, #tpu.memory_space<vmem>>, vector<1x2x2xf32>
    %25 = vector.shape_cast %24 : vector<1x2x2xf32> to vector<2x2xf32>
    %26 = vector.shape_cast %23 : vector<2x2xf32> to vector<1x2x2xf32>
    tpu.vector_store %arg7[%c0_23, %c0_24, %c0_25], %26 {strides = array<i32>} : memref<1x2x2xf32, #tpu.memory_space<vmem>>, vector<1x2x2xf32>,
    %c0_26 = arith.constant 0 : index
    %c0_27 = arith.constant 0 : index
    %c0_28 = arith.constant 0 : index
    %27 = vector.load %arg8[%c0_26, %c0_27, %c0_28] : memref<1x2x1xf32, #tpu.memory_space<vmem>>, vector<1x2x1xf32>
    %28 = vector.shape_cast %27 : vector<1x2x1xf32> to vector<2x1xf32>
    %29 = arith.mulf %3, %3 : vector<2x1024xf32>
    %cst_29 = arith.constant dense<0.000000e+00> : vector<2xf32>
    %30 = vector.multi_reduction <add>, %29, %cst_29 [1] : vector<2x1024xf32> to vector<2xf32>
    %31 = vector.shape_cast %30 : vector<2xf32> to vector<2x1xf32>
    %32 = arith.addf %28, %31 : vector<2x1xf32>
    %c0_30 = arith.constant 0 : index
    %c0_31 = arith.constant 0 : index
    %c0_32 = arith.constant 0 : index
    %33 = vector.load %arg8[%c0_30, %c0_31, %c0_32] : memref<1x2x1xf32, #tpu.memory_space<vmem>>, vector<1x2x1xf32>
    %34 = vector.shape_cast %33 : vector<1x2x1xf32> to vector<2x1xf32>
    %35 = vector.shape_cast %32 : vector<2x1xf32> to vector<1x2x1xf32>
    tpu.vector_store %arg8[%c0_30, %c0_31, %c0_32], %35 {strides = array<i32>} : memref<1x2x1xf32, #tpu.memory_space<vmem>>, vector<1x2x1xf32>,
    %c0_33 = arith.constant 0 : index
    %c0_34 = arith.constant 0 : index
    %c0_35 = arith.constant 0 : index
    %36 = vector.load %arg9[%c0_33, %c0_34, %c0_35] : memref<1x2x1xf32, #tpu.memory_space<vmem>>, vector<1x2x1xf32>
    %37 = vector.shape_cast %36 : vector<1x2x1xf32> to vector<2x1xf32>
    %38 = arith.mulf %4, %4 : vector<2x1024xf32>
    %cst_36 = arith.constant dense<0.000000e+00> : vector<2xf32>
    %39 = vector.multi_reduction <add>, %38, %cst_36 [1] : vector<2x1024xf32> to vector<2xf32>
    %40 = vector.shape_cast %39 : vector<2xf32> to vector<2x1xf32>
    %41 = arith.addf %37, %40 : vector<2x1xf32>
    %c0_37 = arith.constant 0 : index
    %c0_38 = arith.constant 0 : index
    %c0_39 = arith.constant 0 : index
    %42 = vector.load %arg9[%c0_37, %c0_38, %c0_39] : memref<1x2x1xf32, #tpu.memory_space<vmem>>, vector<1x2x1xf32>
    %43 = vector.shape_cast %42 : vector<1x2x1xf32> to vector<2x1xf32>
    %44 = vector.shape_cast %41 : vector<2x1xf32> to vector<1x2x1xf32>
    tpu.vector_store %arg9[%c0_37, %c0_38, %c0_39], %44 {strides = array<i32>} : memref<1x2x1xf32, #tpu.memory_space<vmem>>, vector<1x2x1xf32>,
    %c0_40 = arith.constant 0 : index
    %c0_41 = arith.constant 0 : index
    %c0_42 = arith.constant 0 : index
    %45 = vector.load %arg10[%c0_40, %c0_41, %c0_42] : memref<1x2x1xf32, #tpu.memory_space<vmem>>, vector<1x2x1xf32>
    %46 = vector.shape_cast %45 : vector<1x2x1xf32> to vector<2x1xf32>
    %47 = arith.mulf %5, %5 : vector<2x1024xf32>
    %cst_43 = arith.constant dense<0.000000e+00> : vector<2xf32>
    %48 = vector.multi_reduction <add>, %47, %cst_43 [1] : vector<2x1024xf32> to vector<2xf32>
    %49 = vector.shape_cast %48 : vector<2xf32> to vector<2x1xf32>
    %50 = arith.addf %46, %49 : vector<2x1xf32>
    %c0_44 = arith.constant 0 : index
    %c0_45 = arith.constant 0 : index
    %c0_46 = arith.constant 0 : index
    %51 = vector.load %arg10[%c0_44, %c0_45, %c0_46] : memref<1x2x1xf32, #tpu.memory_space<vmem>>, vector<1x2x1xf32>
    %52 = vector.shape_cast %51 : vector<1x2x1xf32> to vector<2x1xf32>
    %53 = vector.shape_cast %50 : vector<2x1xf32> to vector<1x2x1xf32>
    tpu.vector_store %arg10[%c0_44, %c0_45, %c0_46], %53 {strides = array<i32>} : memref<1x2x1xf32, #tpu.memory_space<vmem>>, vector<1x2x1xf32>,
    return
  }
  func.func @transform_0(%arg0: i32, %arg1: i32) -> (i32, i32) {
    %c1_i32 = arith.constant 1 : i32
    %0 = arith.muli %arg0, %c1_i32 : i32
    %1 = arith.addi %0, %arg1 : i32
    %c0_i32 = arith.constant 0 : i32
    %c0_i32_0 = arith.constant 0 : i32
    return %c0_i32, %1 : i32, i32
  }
  func.func @transform_1(%arg0: i32, %arg1: i32) -> (i32, i32) {
    %c1_i32 = arith.constant 1 : i32
    %0 = arith.muli %arg0, %c1_i32 : i32
    %1 = arith.addi %0, %arg1 : i32
    %c0_i32 = arith.constant 0 : i32
    %c0_i32_0 = arith.constant 0 : i32
    return %c0_i32, %1 : i32, i32
  }
  func.func @transform_2(%arg0: i32, %arg1: i32) -> (i32, i32) {
    %c1_i32 = arith.constant 1 : i32
    %0 = arith.muli %arg0, %c1_i32 : i32
    %1 = arith.addi %0, %arg1 : i32
    %c0_i32 = arith.constant 0 : i32
    %c0_i32_0 = arith.constant 0 : i32
    return %c0_i32, %1 : i32, i32
  }
  func.func @transform_3(%arg0: i32, %arg1: i32) -> (i32, i32, i32) {
    %c0_i32 = arith.constant 0 : i32
    %c0_i32_0 = arith.constant 0 : i32
    %c0_i32_1 = arith.constant 0 : i32
    return %arg0, %c0_i32, %c0_i32_0 : i32, i32, i32
  }
  func.func @transform_4(%arg0: i32, %arg1: i32) -> (i32, i32, i32) {
    %c0_i32 = arith.constant 0 : i32
    %c0_i32_0 = arith.constant 0 : i32
    %c0_i32_1 = arith.constant 0 : i32
    return %arg0, %c0_i32, %c0_i32_0 : i32, i32, i32
  }
  func.func @transform_5(%arg0: i32, %arg1: i32) -> (i32, i32, i32) {
    %c0_i32 = arith.constant 0 : i32
    %c0_i32_0 = arith.constant 0 : i32
    %c0_i32_1 = arith.constant 0 : i32
    return %arg0, %c0_i32, %c0_i32_0 : i32, i32, i32
  }
  func.func @transform_6(%arg0: i32, %arg1: i32) -> (i32, i32, i32) {
    %c0_i32 = arith.constant 0 : i32
    %c0_i32_0 = arith.constant 0 : i32
    %c0_i32_1 = arith.constant 0 : i32
    return %arg0, %c0_i32, %c0_i32_0 : i32, i32, i32
  }
  func.func @transform_7(%arg0: i32, %arg1: i32) -> (i32, i32, i32) {
    %c0_i32 = arith.constant 0 : i32
    %c0_i32_0 = arith.constant 0 : i32
    %c0_i32_1 = arith.constant 0 : i32
    return %arg0, %c0_i32, %c0_i32_0 : i32, i32, i32
  }
  func.func @transform_8(%arg0: i32, %arg1: i32) -> (i32, i32, i32) {
    %c0_i32 = arith.constant 0 : i32
    %c0_i32_0 = arith.constant 0 : i32
    %c0_i32_1 = arith.constant 0 : i32
    return %arg0, %c0_i32, %c0_i32_0 : i32, i32, i32
  }
}

</mosaic_0001>

<llo_original>
// kernel: tpu_custom_call.1
$region0: #{tpu_custom_call.1}
  #allocation0 [shape = 'u32[]', space=smem, size = 0x4, offset = 0x4, fixed_abs, tag = 'smem constant byte address 0x4 - core index']
  #allocation1 [shape = 'u32[144,128]{1,0:T(1,128)}', space=vmem, size = 0x12000, scoped, tag = 'internal scratch']
  %s0 = inlined_call_operand.hbm [shape: f32[2,1024], index: 0, kind: input, shape index: {}]
  %s1 = inlined_call_operand.hbm [shape: f32[2,1024], index: 1, kind: input, shape index: {}]
  %s2 = inlined_call_operand.hbm [shape: f32[2,1024], index: 2, kind: input, shape index: {}]
  %s3 = inlined_call_operand.hbm [shape: f32[1,2,2], index: 3, kind: output, shape index: {0}]
  %s4 = inlined_call_operand.hbm [shape: f32[1,2,2], index: 4, kind: output, shape index: {1}]
  %s5 = inlined_call_operand.hbm [shape: f32[1,2,2], index: 5, kind: output, shape index: {2}]
  %s6 = inlined_call_operand.vmem [shape: f32[1,2,1], index: 6, kind: output, shape index: {3}]
  %s7 = inlined_call_operand.vmem [shape: f32[1,2,1], index: 7, kind: output, shape index: {4}]
  %s8 = inlined_call_operand.vmem [shape: f32[1,2,1], index: 8, kind: output, shape index: {5}]
  %9 = xla_tuple %s3, %s4, %s5, %s6, %s7, %s8
  %s10 = sld [smem:[#allocation0]]
  $region78: #{tpu_custom_call.1} parent=0
    _
  %s12 = ssub.s32 1, %s10
  %s13 = scalar_select 0, %s12, %s10
  $region1: #{tpu_custom_call.1} parent=0
    #allocation2 [shape = 'u8[8192]{0}', space=vmem, size = 0x2000, scoped, tag = 'input window, operand 0, single buffered']
    #allocation3 [shape = 's32[1]{0}', space=sflag, size = 0x4, scoped, tag = 'scoped memory for tpu_custom_call.1']
    #allocation4 [shape = 's32[1]{0}', space=sflag, size = 0x4, scoped, tag = 'scoped memory for tpu_custom_call.1']
    #allocation5 [shape = 'u8[8192]{0}', space=vmem, size = 0x2000, scoped, tag = 'input window, operand 1, single buffered']
    #allocation6 [shape = 's32[1]{0}', space=sflag, size = 0x4, scoped, tag = 'scoped memory for tpu_custom_call.1']
    #allocation7 [shape = 'u8[8192]{0}', space=vmem, size = 0x2000, scoped, tag = 'input window, operand 2, single buffered']
    #allocation8 [shape = 'u8[1024]{0}', space=vmem, size = 0x400, scoped, tag = 'output window, operand 0, single buffered']
    #allocation9 [shape = 'u8[1024]{0}', space=vmem, size = 0x400, scoped, tag = 'output window, operand 1, single buffered']
    #allocation10 [shape = 's32[1]{0}', space=sflag, size = 0x4, scoped, tag = 'scoped memory for tpu_custom_call.1']
    #allocation11 [shape = 'u8[1024]{0}', space=vmem, size = 0x400, scoped, tag = 'output window, operand 2, single buffered']
    %14 = vsyncpa [#allocation3], 0
    %15 = vsyncpa [#allocation6], 0
    %16 = vsyncpa [#allocation4], 0
    %17 = vsyncpa [#allocation10], 0
    // Predicated region
    $region2: #{tpu_custom_call.1} parent=1 // pred_check
      _
    $region3: #{tpu_custom_call.1} parent=1 // pred_check_branch
      %19 = sbr.rel (0) target = $region5
    $region4: #{tpu_custom_call.1} parent=1 // pred_region
      %s20 = sadd.s32 0, 0
      %s21 = smul.u32 8, %s20
      %s23 = ssub.s32 256, 256
      %24 = vsyncadd [#allocation3], %s23
      %s25 = smul.addr %s21, 32
      %s26 = scalar_lea.hbm %s0, %s25
      %s28 = sshll.u32 [#allocation2], 4
      %s29 = int_to_ptr.vmem [resolvable:$true] %s28
      %31 = dma.hbm_to_vmem [thread:$0]  %s26, 256, %s29, [#allocation3]
    $region5: #{tpu_custom_call.1} parent=1 // pred_fallthru
      _
    // Predicated region
    $region6: #{tpu_custom_call.1} parent=1 // pred_check
      _
    $region7: #{tpu_custom_call.1} parent=1 // pred_check_branch
      %33 = sbr.rel (0) target = $region9
    $region8: #{tpu_custom_call.1} parent=1 // pred_region
      %s34 = sadd.s32 0, 0
      %s35 = smul.u32 8, %s34
      %s37 = ssub.s32 256, 256
      %38 = vsyncadd [#allocation6], %s37
      %s39 = smul.addr %s35, 32
      %s40 = scalar_lea.hbm %s1, %s39
      %s42 = sshll.u32 [#allocation5], 4
      %s43 = int_to_ptr.vmem [resolvable:$true] %s42
      %45 = dma.hbm_to_vmem [thread:$0]  %s40, 256, %s43, [#allocation6]
    $region9: #{tpu_custom_call.1} parent=1 // pred_fallthru
      _
    // Predicated region
    $region10: #{tpu_custom_call.1} parent=1 // pred_check
      _
    $region11: #{tpu_custom_call.1} parent=1 // pred_check_branch
      %47 = sbr.rel (0) target = $region13
    $region12: #{tpu_custom_call.1} parent=1 // pred_region
      %s48 = sadd.s32 0, 0
      %s49 = smul.u32 8, %s48
      %s51 = ssub.s32 256, 256
      %52 = vsyncadd [#allocation6], %s51
      %s53 = smul.addr %s49, 32
      %s54 = scalar_lea.hbm %s2, %s53
      %s56 = sshll.u32 [#allocation7], 4
      %s57 = int_to_ptr.vmem [resolvable:$true] %s56
      %59 = dma.hbm_to_vmem [thread:$0]  %s54, 256, %s57, [#allocation6]
    $region13: #{tpu_custom_call.1} parent=1 // pred_fallthru
      _
    // Predicated region
    $region14: #{tpu_custom_call.1} parent=1 // pred_check
      _
    $region15: #{tpu_custom_call.1} parent=1 // pred_check_branch
      %61 = sbr.rel (0) target = $region17
    $region16: #{tpu_custom_call.1} parent=1 // pred_region
      %62 = dma.done [#allocation3], 256
    $region17: #{tpu_custom_call.1} parent=1 // pred_fallthru
      _
    // Predicated region
    $region18: #{tpu_custom_call.1} parent=1 // pred_check
      _
    $region19: #{tpu_custom_call.1} parent=1 // pred_check_branch
      %64 = sbr.rel (0) target = $region21
    $region20: #{tpu_custom_call.1} parent=1 // pred_region
      %65 = dma.done [#allocation6], 256
    $region21: #{tpu_custom_call.1} parent=1 // pred_fallthru
      _
    // Predicated region
    $region22: #{tpu_custom_call.1} parent=1 // pred_check
      _
    $region23: #{tpu_custom_call.1} parent=1 // pred_check_branch
      %67 = sbr.rel (0) target = $region25
    $region24: #{tpu_custom_call.1} parent=1 // pred_region
      %68 = dma.done [#allocation6], 256
    $region25: #{tpu_custom_call.1} parent=1 // pred_fallthru
      _
    %s69 = sadd.s32 0, 0
    %s70 = smul.u32 8, %s69
    %s71 = sadd.s32 0, 0
    %s72 = smul.u32 8, %s71
    %s73 = sadd.s32 0, 0
    %s74 = smul.u32 8, %s73
    %p75 = scmp.eq.s32.totalorder 0, 0
    // Predicated region
    $region26: #{tpu_custom_call.1} parent=1 // pred_check
      %p76 = pneg %p75
    $region27: #{tpu_custom_call.1} parent=1 // pred_check_branch
      %78 = sbr.rel (%p76) target = $region29
    $region28: #{tpu_custom_call.1} parent=1 // pred_region
      %vm79 = vcmask 9216
      %80 = vst.msk [vmem:[#allocation8] sm:$0x3] %vm79, 0.0
      %81 = vst.msk [vmem:[#allocation9] sm:$0x3] %vm79, 0.0
      %82 = vst.msk [vmem:[#allocation11] sm:$0x3] %vm79, 0.0
      %vm83 = vcmask 1024
      %84 = vst.msk [vmem:[%s6] sm:$0x3] %vm83, 0.0
      %85 = vst.msk [vmem:[%s7] sm:$0x3] %vm83, 0.0
      %86 = vst.msk [vmem:[%s8] sm:$0x3] %vm83, 0.0
    $region29: #{tpu_custom_call.1} parent=1 // pred_fallthru
      _
    %v87 = vld [vmem:[#allocation2] sm:$0xff]
    %v88 = vld [vmem:[#allocation2 + $0x8] sm:$0xff]
    %v89 = vld [vmem:[#allocation5] sm:$0xff]
    %v90 = vld [vmem:[#allocation5 + $0x8] sm:$0xff]
    %v91 = vld [vmem:[#allocation7] sm:$0xff]
    %v92 = vld [vmem:[#allocation7 + $0x8] sm:$0xff]
    %v93 = vld [vmem:[#allocation8] sm:$0x3]
    %v96 = vcombine.high %v87, %v87
    %v98 = vunpack.c.l.s4 1983009808
    %v99 = vunpack.c.0.s8 %v98
    %v100 = vlaneseq
    %v101 = vshrl.u32 %v100, 7
    %v102 = vsub.s32 %v99, %v101
    %v103 = vrot.slane %v87, %v102
    %v105 = vunpack.c.l.s4 1983009808
    %v106 = vunpack.c.0.s8 %v105
    %v107 = vlaneseq
    %v108 = vshrl.u32 %v107, 7
    %v109 = vsub.s32 %v106, %v108
    %v110 = vrot.slane %v96, %v109
    %v111 = vcombine.high %v103, %v103
    %v112 = vcombine.high %v110, %v110
    %v113 = vcombine.high %v88, %v88
    %v115 = vunpack.c.l.s4 1983009808
    %v116 = vunpack.c.0.s8 %v115
    %v117 = vlaneseq
    %v118 = vshrl.u32 %v117, 7
    %v119 = vsub.s32 %v116, %v118
    %v120 = vrot.slane %v88, %v119
    %v122 = vunpack.c.l.s4 1983009808
    %v123 = vunpack.c.0.s8 %v122
    %v124 = vlaneseq
    %v125 = vshrl.u32 %v124, 7
    %v126 = vsub.s32 %v123, %v125
    %v127 = vrot.slane %v113, %v126
    %v128 = vcombine.high %v120, %v120
    %v129 = vcombine.high %v127, %v127
    %v140 = vcombine.high %v89, %v89
    %v142 = vunpack.c.l.s4 1983009808
    %v143 = vunpack.c.0.s8 %v142
    %v144 = vlaneseq
    %v145 = vshrl.u32 %v144, 7
    %v146 = vsub.s32 %v143, %v145
    %v147 = vrot.slane %v89, %v146
    %v149 = vunpack.c.l.s4 1983009808
    %v150 = vunpack.c.0.s8 %v149
    %v151 = vlaneseq
    %v152 = vshrl.u32 %v151, 7
    %v153 = vsub.s32 %v150, %v152
    %v154 = vrot.slane %v140, %v153
    %v155 = vcombine.high %v147, %v147
    %v156 = vcombine.high %v154, %v154
    %v157 = vcombine.high %v90, %v90
    %v159 = vunpack.c.l.s4 1983009808
    %v160 = vunpack.c.0.s8 %v159
    %v161 = vlaneseq
    %v162 = vshrl.u32 %v161, 7
    %v163 = vsub.s32 %v160, %v162
    %v164 = vrot.slane %v90, %v163
    %v166 = vunpack.c.l.s4 1983009808
    %v167 = vunpack.c.0.s8 %v166
    %v168 = vlaneseq
    %v169 = vshrl.u32 %v168, 7
    %v170 = vsub.s32 %v167, %v169
    %v171 = vrot.slane %v157, %v170
    %v172 = vcombine.high %v164, %v164
    %v173 = vcombine.high %v171, %v171
    %182 = vmatprep.subr.mxu0 0.0
    %183 = vmatpush1.xpose.msra.mxu0 0.0
    %184 = vmatprep.subr.mxu0 0.0
    %185 = vmatpush1.xpose.msra.mxu0 0.0
    %186 = vmatprep.subr.mxu0 0.0
    %187 = vmatpush1.xpose.msra.mxu0 0.0
    %188 = vmatprep.subr.mxu0 0.0
    %189 = vmatpush1.xpose.msra.mxu0 0.0
    %190 = vmatprep.subr.mxu0 0.0
    %191 = vmatpush1.xpose.msra.mxu0 0.0
    %192 = vmatprep.subr.mxu0 0.0
    %193 = vmatpush1.xpose.msra.mxu0 0.0
    %194 = vmatprep.subr.mxu0 0.0
    %195 = vmatpush1.xpose.msra.mxu0 0.0
    %196 = vmatprep.subr.mxu0 0.0
    %197 = vmatpush1.xpose.msra.mxu0 0.0
    %198 = vmatprep.subr.mxu0 0.0
    %199 = vmatpush1.xpose.msra.mxu0 0.0
    %200 = vmatprep.subr.mxu0 0.0
    %201 = vmatpush1.xpose.msra.mxu0 0.0
    %202 = vmatprep.subr.mxu0 0.0
    %203 = vmatpush1.xpose.msra.mxu0 0.0
    %204 = vmatprep.subr.mxu0 0.0
    %205 = vmatpush1.xpose.msra.mxu0 0.0
    %206 = vmatprep.subr.mxu0 0.0
    %207 = vmatpush1.xpose.msra.mxu0 0.0
    %208 = vmatprep.subr.mxu0 0.0
    %209 = vmatpush1.xpose.msra.mxu0 0.0
    %210 = vmatprep.subr.mxu0 0.0
    %211 = vmatpush1.xpose.msra.mxu0 0.0
    %212 = vmatprep.subr.mxu0 %v155
    %213 = vmatpush1.xpose.msra.mxu0 %v147
    %214 = vmatprep.subr.mxu0 0.0
    %215 = vmatpush2.xpose.msra.mxu0 0.0
    %216 = vmatprep.subr.mxu0 0.0
    %217 = vmatpush2.xpose.msra.mxu0 0.0
    %218 = vmatprep.subr.mxu0 0.0
    %219 = vmatpush2.xpose.msra.mxu0 0.0
    %220 = vmatprep.subr.mxu0 0.0
    %221 = vmatpush2.xpose.msra.mxu0 0.0
    %222 = vmatprep.subr.mxu0 0.0
    %223 = vmatpush2.xpose.msra.mxu0 0.0
    %224 = vmatprep.subr.mxu0 0.0
    %225 = vmatpush2.xpose.msra.mxu0 0.0
    %226 = vmatprep.subr.mxu0 0.0
    %227 = vmatpush2.xpose.msra.mxu0 0.0
    %228 = vmatprep.subr.mxu0 0.0
    %229 = vmatpush2.xpose.msra.mxu0 0.0
    %230 = vmatprep.subr.mxu0 0.0
    %231 = vmatpush2.xpose.msra.mxu0 0.0
    %232 = vmatprep.subr.mxu0 0.0
    %233 = vmatpush2.xpose.msra.mxu0 0.0
    %234 = vmatprep.subr.mxu0 0.0
    %235 = vmatpush2.xpose.msra.mxu0 0.0
    %236 = vmatprep.subr.mxu0 0.0
    %237 = vmatpush2.xpose.msra.mxu0 0.0
    %238 = vmatprep.subr.mxu0 0.0
    %239 = vmatpush2.xpose.msra.mxu0 0.0
    %240 = vmatprep.subr.mxu0 0.0
    %241 = vmatpush2.xpose.msra.mxu0 0.0
    %242 = vmatprep.subr.mxu0 0.0
    %243 = vmatpush2.xpose.msra.mxu0 0.0
    %244 = vmatprep.subr.mxu0 0.0
    %245 = vmatpush2.xpose.msra.mxu0 0.0
    %246 = vmatprep.mubr.f32.mxu0 %v111
    %247 = vmatmul.mubr.f32.gmra.mxu0 %v103
    %v248 = vpop.f32.mrf.mxu0
    %v249 = vadd.f32 0.0, %v248
    %v250 = vpop.f32.mrf.mxu0
    %251 = vdwg.mxu0
    %252 = vmatprep.subr.mxu0 0.0
    %253 = vmatpush1.xpose.msra.mxu0 0.0
    %254 = vmatprep.subr.mxu0 0.0
    %255 = vmatpush1.xpose.msra.mxu0 0.0
    %256 = vmatprep.subr.mxu0 0.0
    %257 = vmatpush1.xpose.msra.mxu0 0.0
    %258 = vmatprep.subr.mxu0 0.0
    %259 = vmatpush1.xpose.msra.mxu0 0.0
    %260 = vmatprep.subr.mxu0 0.0
    %261 = vmatpush1.xpose.msra.mxu0 0.0
    %262 = vmatprep.subr.mxu0 0.0
    %263 = vmatpush1.xpose.msra.mxu0 0.0
    %264 = vmatprep.subr.mxu0 0.0
    %265 = vmatpush1.xpose.msra.mxu0 0.0
    %266 = vmatprep.subr.mxu0 0.0
    %267 = vmatpush1.xpose.msra.mxu0 0.0
    %268 = vmatprep.subr.mxu0 0.0
    %269 = vmatpush1.xpose.msra.mxu0 0.0
    %270 = vmatprep.subr.mxu0 0.0
    %271 = vmatpush1.xpose.msra.mxu0 0.0
    %272 = vmatprep.subr.mxu0 0.0
    %273 = vmatpush1.xpose.msra.mxu0 0.0
    %274 = vmatprep.subr.mxu0 0.0
    %275 = vmatpush1.xpose.msra.mxu0 0.0
    %276 = vmatprep.subr.mxu0 0.0
    %277 = vmatpush1.xpose.msra.mxu0 0.0
    %278 = vmatprep.subr.mxu0 0.0
    %279 = vmatpush1.xpose.msra.mxu0 0.0
    %280 = vmatprep.subr.mxu0 0.0
    %281 = vmatpush1.xpose.msra.mxu0 0.0
    %282 = vmatprep.subr.mxu0 %v156
    %283 = vmatpush1.xpose.msra.mxu0 %v154
    %284 = vmatprep.subr.mxu0 0.0
    %285 = vmatpush2.xpose.msra.mxu0 0.0
    %286 = vmatprep.subr.mxu0 0.0
    %287 = vmatpush2.xpose.msra.mxu0 0.0
    %288 = vmatprep.subr.mxu0 0.0
    %289 = vmatpush2.xpose.msra.mxu0 0.0
    %290 = vmatprep.subr.mxu0 0.0
    %291 = vmatpush2.xpose.msra.mxu0 0.0
    %292 = vmatprep.subr.mxu0 0.0
    %293 = vmatpush2.xpose.msra.mxu0 0.0
    %294 = vmatprep.subr.mxu0 0.0
    %295 = vmatpush2.xpose.msra.mxu0 0.0
    %296 = vmatprep.subr.mxu0 0.0
    %297 = vmatpush2.xpose.msra.mxu0 0.0
    %298 = vmatprep.subr.mxu0 0.0
    %299 = vmatpush2.xpose.msra.mxu0 0.0
    %300 = vmatprep.subr.mxu0 0.0
    %301 = vmatpush2.xpose.msra.mxu0 0.0
    %302 = vmatprep.subr.mxu0 0.0
    %303 = vmatpush2.xpose.msra.mxu0 0.0
    %304 = vmatprep.subr.mxu0 0.0
    %305 = vmatpush2.xpose.msra.mxu0 0.0
    %306 = vmatprep.subr.mxu0 0.0
    %307 = vmatpush2.xpose.msra.mxu0 0.0
    %308 = vmatprep.subr.mxu0 0.0
    %309 = vmatpush2.xpose.msra.mxu0 0.0
    %310 = vmatprep.subr.mxu0 0.0
    %311 = vmatpush2.xpose.msra.mxu0 0.0
    %312 = vmatprep.subr.mxu0 0.0
    %313 = vmatpush2.xpose.msra.mxu0 0.0
    %314 = vmatprep.subr.mxu0 0.0
    %315 = vmatpush2.xpose.msra.mxu0 0.0
    %316 = vmatprep.mubr.f32.mxu0 %v112
    %317 = vmatmul.mubr.f32.gmra.mxu0 %v110
    %v318 = vpop.f32.mrf.mxu0
    %v319 = vadd.f32 %v249, %v318
    %v320 = vpop.f32.mrf.mxu0
    %321 = vdwg.mxu0
    %322 = vmatprep.subr.mxu0 0.0
    %323 = vmatpush1.xpose.msra.mxu0 0.0
    %324 = vmatprep.subr.mxu0 0.0
    %325 = vmatpush1.xpose.msra.mxu0 0.0
    %326 = vmatprep.subr.mxu0 0.0
    %327 = vmatpush1.xpose.msra.mxu0 0.0
    %328 = vmatprep.subr.mxu0 0.0
    %329 = vmatpush1.xpose.msra.mxu0 0.0
    %330 = vmatprep.subr.mxu0 0.0
    %331 = vmatpush1.xpose.msra.mxu0 0.0
    %332 = vmatprep.subr.mxu0 0.0
    %333 = vmatpush1.xpose.msra.mxu0 0.0
    %334 = vmatprep.subr.mxu0 0.0
    %335 = vmatpush1.xpose.msra.mxu0 0.0
    %336 = vmatprep.subr.mxu0 0.0
    %337 = vmatpush1.xpose.msra.mxu0 0.0
    %338 = vmatprep.subr.mxu0 0.0
    %339 = vmatpush1.xpose.msra.mxu0 0.0
    %340 = vmatprep.subr.mxu0 0.0
    %341 = vmatpush1.xpose.msra.mxu0 0.0
    %342 = vmatprep.subr.mxu0 0.0
    %343 = vmatpush1.xpose.msra.mxu0 0.0
    %344 = vmatprep.subr.mxu0 0.0
    %345 = vmatpush1.xpose.msra.mxu0 0.0
    %346 = vmatprep.subr.mxu0 0.0
    %347 = vmatpush1.xpose.msra.mxu0 0.0
    %348 = vmatprep.subr.mxu0 0.0
    %349 = vmatpush1.xpose.msra.mxu0 0.0
    %350 = vmatprep.subr.mxu0 0.0
    %351 = vmatpush1.xpose.msra.mxu0 0.0
    %352 = vmatprep.subr.mxu0 %v172
    %353 = vmatpush1.xpose.msra.mxu0 %v164
    %354 = vmatprep.subr.mxu0 0.0
    %355 = vmatpush2.xpose.msra.mxu0 0.0
    %356 = vmatprep.subr.mxu0 0.0
    %357 = vmatpush2.xpose.msra.mxu0 0.0
    %358 = vmatprep.subr.mxu0 0.0
    %359 = vmatpush2.xpose.msra.mxu0 0.0
    %360 = vmatprep.subr.mxu0 0.0
    %361 = vmatpush2.xpose.msra.mxu0 0.0
    %362 = vmatprep.subr.mxu0 0.0
    %363 = vmatpush2.xpose.msra.mxu0 0.0
    %364 = vmatprep.subr.mxu0 0.0
    %365 = vmatpush2.xpose.msra.mxu0 0.0
    %366 = vmatprep.subr.mxu0 0.0
    %367 = vmatpush2.xpose.msra.mxu0 0.0
    %368 = vmatprep.subr.mxu0 0.0
    %369 = vmatpush2.xpose.msra.mxu0 0.0
    %370 = vmatprep.subr.mxu0 0.0
    %371 = vmatpush2.xpose.msra.mxu0 0.0
    %372 = vmatprep.subr.mxu0 0.0
    %373 = vmatpush2.xpose.msra.mxu0 0.0
    %374 = vmatprep.subr.mxu0 0.0
    %375 = vmatpush2.xpose.msra.mxu0 0.0
    %376 = vmatprep.subr.mxu0 0.0
    %377 = vmatpush2.xpose.msra.mxu0 0.0
    %378 = vmatprep.subr.mxu0 0.0
    %379 = vmatpush2.xpose.msra.mxu0 0.0
    %380 = vmatprep.subr.mxu0 0.0
    %381 = vmatpush2.xpose.msra.mxu0 0.0
    %382 = vmatprep.subr.mxu0 0.0
    %383 = vmatpush2.xpose.msra.mxu0 0.0
    %384 = vmatprep.subr.mxu0 0.0
    %385 = vmatpush2.xpose.msra.mxu0 0.0
    %386 = vmatprep.mubr.f32.mxu0 %v128
    %387 = vmatmul.mubr.f32.gmra.mxu0 %v120
    %v388 = vpop.f32.mrf.mxu0
    %v389 = vadd.f32 %v319, %v388
    %v390 = vpop.f32.mrf.mxu0
    %391 = vdwg.mxu0
    %392 = vmatprep.subr.mxu0 0.0
    %393 = vmatpush1.xpose.msra.mxu0 0.0
    %394 = vmatprep.subr.mxu0 0.0
    %395 = vmatpush1.xpose.msra.mxu0 0.0
    %396 = vmatprep.subr.mxu0 0.0
    %397 = vmatpush1.xpose.msra.mxu0 0.0
    %398 = vmatprep.subr.mxu0 0.0
    %399 = vmatpush1.xpose.msra.mxu0 0.0
    %400 = vmatprep.subr.mxu0 0.0
    %401 = vmatpush1.xpose.msra.mxu0 0.0
    %402 = vmatprep.subr.mxu0 0.0
    %403 = vmatpush1.xpose.msra.mxu0 0.0
    %404 = vmatprep.subr.mxu0 0.0
    %405 = vmatpush1.xpose.msra.mxu0 0.0
    %406 = vmatprep.subr.mxu0 0.0
    %407 = vmatpush1.xpose.msra.mxu0 0.0
    %408 = vmatprep.subr.mxu0 0.0
    %409 = vmatpush1.xpose.msra.mxu0 0.0
    %410 = vmatprep.subr.mxu0 0.0
    %411 = vmatpush1.xpose.msra.mxu0 0.0
    %412 = vmatprep.subr.mxu0 0.0
    %413 = vmatpush1.xpose.msra.mxu0 0.0
    %414 = vmatprep.subr.mxu0 0.0
    %415 = vmatpush1.xpose.msra.mxu0 0.0
    %416 = vmatprep.subr.mxu0 0.0
    %417 = vmatpush1.xpose.msra.mxu0 0.0
    %418 = vmatprep.subr.mxu0 0.0
    %419 = vmatpush1.xpose.msra.mxu0 0.0
    %420 = vmatprep.subr.mxu0 0.0
    %421 = vmatpush1.xpose.msra.mxu0 0.0
    %422 = vmatprep.subr.mxu0 %v173
    %423 = vmatpush1.xpose.msra.mxu0 %v171
    %424 = vmatprep.subr.mxu0 0.0
    %425 = vmatpush2.xpose.msra.mxu0 0.0
    %426 = vmatprep.subr.mxu0 0.0
    %427 = vmatpush2.xpose.msra.mxu0 0.0
    %428 = vmatprep.subr.mxu0 0.0
    %429 = vmatpush2.xpose.msra.mxu0 0.0
    %430 = vmatprep.subr.mxu0 0.0
    %431 = vmatpush2.xpose.msra.mxu0 0.0
    %432 = vmatprep.subr.mxu0 0.0
    %433 = vmatpush2.xpose.msra.mxu0 0.0
    %434 = vmatprep.subr.mxu0 0.0
    %435 = vmatpush2.xpose.msra.mxu0 0.0
    %436 = vmatprep.subr.mxu0 0.0
    %437 = vmatpush2.xpose.msra.mxu0 0.0
    %438 = vmatprep.subr.mxu0 0.0
    %439 = vmatpush2.xpose.msra.mxu0 0.0
    %440 = vmatprep.subr.mxu0 0.0
    %441 = vmatpush2.xpose.msra.mxu0 0.0
    %442 = vmatprep.subr.mxu0 0.0
    %443 = vmatpush2.xpose.msra.mxu0 0.0
    %444 = vmatprep.subr.mxu0 0.0
    %445 = vmatpush2.xpose.msra.mxu0 0.0
    %446 = vmatprep.subr.mxu0 0.0
    %447 = vmatpush2.xpose.msra.mxu0 0.0
    %448 = vmatprep.subr.mxu0 0.0
    %449 = vmatpush2.xpose.msra.mxu0 0.0
    %450 = vmatprep.subr.mxu0 0.0
    %451 = vmatpush2.xpose.msra.mxu0 0.0
    %452 = vmatprep.subr.mxu0 0.0
    %453 = vmatpush2.xpose.msra.mxu0 0.0
    %454 = vmatprep.subr.mxu0 0.0
    %455 = vmatpush2.xpose.msra.mxu0 0.0
    %456 = vmatprep.mubr.f32.mxu0 %v129
    %457 = vmatmul.mubr.f32.gmra.mxu0 %v127
    %v458 = vpop.f32.mrf.mxu0
    %v459 = vadd.f32 %v389, %v458
    %v460 = vpop.f32.mrf.mxu0
    %461 = vdwg.mxu0
    %v462 = vadd.f32 %v93, %v459
    %vm463 = vcmask 9216
    %464 = vst.msk [vmem:[#allocation8] sm:$0x3] %vm463, %v462
    %v465 = vld [vmem:[#allocation9] sm:$0x3]
    %v468 = vcombine.high %v91, %v91
    %v470 = vunpack.c.l.s4 1983009808
    %v471 = vunpack.c.0.s8 %v470
    %v472 = vlaneseq
    %v473 = vshrl.u32 %v472, 7
    %v474 = vsub.s32 %v471, %v473
    %v475 = vrot.slane %v91, %v474
    %v477 = vunpack.c.l.s4 1983009808
    %v478 = vunpack.c.0.s8 %v477
    %v479 = vlaneseq
    %v480 = vshrl.u32 %v479, 7
    %v481 = vsub.s32 %v478, %v480
    %v482 = vrot.slane %v468, %v481
    %v483 = vcombine.high %v475, %v475
    %v484 = vcombine.high %v482, %v482
    %v485 = vcombine.high %v92, %v92
    %v487 = vunpack.c.l.s4 1983009808
    %v488 = vunpack.c.0.s8 %v487
    %v489 = vlaneseq
    %v490 = vshrl.u32 %v489, 7
    %v491 = vsub.s32 %v488, %v490
    %v492 = vrot.slane %v92, %v491
    %v494 = vunpack.c.l.s4 1983009808
    %v495 = vunpack.c.0.s8 %v494
    %v496 = vlaneseq
    %v497 = vshrl.u32 %v496, 7
    %v498 = vsub.s32 %v495, %v497
    %v499 = vrot.slane %v485, %v498
    %v500 = vcombine.high %v492, %v492
    %v501 = vcombine.high %v499, %v499
    %510 = vmatprep.subr.mxu0 0.0
    %511 = vmatpush1.xpose.msra.mxu0 0.0
    %512 = vmatprep.subr.mxu0 0.0
    %513 = vmatpush1.xpose.msra.mxu0 0.0
    %514 = vmatprep.subr.mxu0 0.0
    %515 = vmatpush1.xpose.msra.mxu0 0.0
    %516 = vmatprep.subr.mxu0 0.0
    %517 = vmatpush1.xpose.msra.mxu0 0.0
    %518 = vmatprep.subr.mxu0 0.0
    %519 = vmatpush1.xpose.msra.mxu0 0.0
    %520 = vmatprep.subr.mxu0 0.0
    %521 = vmatpush1.xpose.msra.mxu0 0.0
    %522 = vmatprep.subr.mxu0 0.0
    %523 = vmatpush1.xpose.msra.mxu0 0.0
    %524 = vmatprep.subr.mxu0 0.0
    %525 = vmatpush1.xpose.msra.mxu0 0.0
    %526 = vmatprep.subr.mxu0 0.0
    %527 = vmatpush1.xpose.msra.mxu0 0.0
    %528 = vmatprep.subr.mxu0 0.0
    %529 = vmatpush1.xpose.msra.mxu0 0.0
    %530 = vmatprep.subr.mxu0 0.0
    %531 = vmatpush1.xpose.msra.mxu0 0.0
    %532 = vmatprep.subr.mxu0 0.0
    %533 = vmatpush1.xpose.msra.mxu0 0.0
    %534 = vmatprep.subr.mxu0 0.0
    %535 = vmatpush1.xpose.msra.mxu0 0.0
    %536 = vmatprep.subr.mxu0 0.0
    %537 = vmatpush1.xpose.msra.mxu0 0.0
    %538 = vmatprep.subr.mxu0 0.0
    %539 = vmatpush1.xpose.msra.mxu0 0.0
    %540 = vmatprep.subr.mxu0 %v483
    %541 = vmatpush1.xpose.msra.mxu0 %v475
    %542 = vmatprep.subr.mxu0 0.0
    %543 = vmatpush2.xpose.msra.mxu0 0.0
    %544 = vmatprep.subr.mxu0 0.0
    %545 = vmatpush2.xpose.msra.mxu0 0.0
    %546 = vmatprep.subr.mxu0 0.0
    %547 = vmatpush2.xpose.msra.mxu0 0.0
    %548 = vmatprep.subr.mxu0 0.0
    %549 = vmatpush2.xpose.msra.mxu0 0.0
    %550 = vmatprep.subr.mxu0 0.0
    %551 = vmatpush2.xpose.msra.mxu0 0.0
    %552 = vmatprep.subr.mxu0 0.0
    %553 = vmatpush2.xpose.msra.mxu0 0.0
    %554 = vmatprep.subr.mxu0 0.0
    %555 = vmatpush2.xpose.msra.mxu0 0.0
    %556 = vmatprep.subr.mxu0 0.0
    %557 = vmatpush2.xpose.msra.mxu0 0.0
    %558 = vmatprep.subr.mxu0 0.0
    %559 = vmatpush2.xpose.msra.mxu0 0.0
    %560 = vmatprep.subr.mxu0 0.0
    %561 = vmatpush2.xpose.msra.mxu0 0.0
    %562 = vmatprep.subr.mxu0 0.0
    %563 = vmatpush2.xpose.msra.mxu0 0.0
    %564 = vmatprep.subr.mxu0 0.0
    %565 = vmatpush2.xpose.msra.mxu0 0.0
    %566 = vmatprep.subr.mxu0 0.0
    %567 = vmatpush2.xpose.msra.mxu0 0.0
    %568 = vmatprep.subr.mxu0 0.0
    %569 = vmatpush2.xpose.msra.mxu0 0.0
    %570 = vmatprep.subr.mxu0 0.0
    %571 = vmatpush2.xpose.msra.mxu0 0.0
    %572 = vmatprep.subr.mxu0 0.0
    %573 = vmatpush2.xpose.msra.mxu0 0.0
    %574 = vmatprep.mubr.f32.mxu0 %v111
    %575 = vmatmul.mubr.f32.gmra.mxu0 %v103
    %v576 = vpop.f32.mrf.mxu0
    %v577 = vadd.f32 0.0, %v576
    %v578 = vpop.f32.mrf.mxu0
    %579 = vdwg.mxu0
    %580 = vmatprep.subr.mxu0 0.0
    %581 = vmatpush1.xpose.msra.mxu0 0.0
    %582 = vmatprep.subr.mxu0 0.0
    %583 = vmatpush1.xpose.msra.mxu0 0.0
    %584 = vmatprep.subr.mxu0 0.0
    %585 = vmatpush1.xpose.msra.mxu0 0.0
    %586 = vmatprep.subr.mxu0 0.0
    %587 = vmatpush1.xpose.msra.mxu0 0.0
    %588 = vmatprep.subr.mxu0 0.0
    %589 = vmatpush1.xpose.msra.mxu0 0.0
    %590 = vmatprep.subr.mxu0 0.0
    %591 = vmatpush1.xpose.msra.mxu0 0.0
    %592 = vmatprep.subr.mxu0 0.0
    %593 = vmatpush1.xpose.msra.mxu0 0.0
    %594 = vmatprep.subr.mxu0 0.0
    %595 = vmatpush1.xpose.msra.mxu0 0.0
    %596 = vmatprep.subr.mxu0 0.0
    %597 = vmatpush1.xpose.msra.mxu0 0.0
    %598 = vmatprep.subr.mxu0 0.0
    %599 = vmatpush1.xpose.msra.mxu0 0.0
    %600 = vmatprep.subr.mxu0 0.0
    %601 = vmatpush1.xpose.msra.mxu0 0.0
    %602 = vmatprep.subr.mxu0 0.0
    %603 = vmatpush1.xpose.msra.mxu0 0.0
    %604 = vmatprep.subr.mxu0 0.0
    %605 = vmatpush1.xpose.msra.mxu0 0.0
    %606 = vmatprep.subr.mxu0 0.0
    %607 = vmatpush1.xpose.msra.mxu0 0.0
    %608 = vmatprep.subr.mxu0 0.0
    %609 = vmatpush1.xpose.msra.mxu0 0.0
    %610 = vmatprep.subr.mxu0 %v484
    %611 = vmatpush1.xpose.msra.mxu0 %v482
    %612 = vmatprep.subr.mxu0 0.0
    %613 = vmatpush2.xpose.msra.mxu0 0.0
    %614 = vmatprep.subr.mxu0 0.0
    %615 = vmatpush2.xpose.msra.mxu0 0.0
    %616 = vmatprep.subr.mxu0 0.0
    %617 = vmatpush2.xpose.msra.mxu0 0.0
    %618 = vmatprep.subr.mxu0 0.0
    %619 = vmatpush2.xpose.msra.mxu0 0.0
    %620 = vmatprep.subr.mxu0 0.0
    %621 = vmatpush2.xpose.msra.mxu0 0.0
    %622 = vmatprep.subr.mxu0 0.0
    %623 = vmatpush2.xpose.msra.mxu0 0.0
    %624 = vmatprep.subr.mxu0 0.0
    %625 = vmatpush2.xpose.msra.mxu0 0.0
    %626 = vmatprep.subr.mxu0 0.0
    %627 = vmatpush2.xpose.msra.mxu0 0.0
    %628 = vmatprep.subr.mxu0 0.0
    %629 = vmatpush2.xpose.msra.mxu0 0.0
    %630 = vmatprep.subr.mxu0 0.0
    %631 = vmatpush2.xpose.msra.mxu0 0.0
    %632 = vmatprep.subr.mxu0 0.0
    %633 = vmatpush2.xpose.msra.mxu0 0.0
    %634 = vmatprep.subr.mxu0 0.0
    %635 = vmatpush2.xpose.msra.mxu0 0.0
    %636 = vmatprep.subr.mxu0 0.0
    %637 = vmatpush2.xpose.msra.mxu0 0.0
    %638 = vmatprep.subr.mxu0 0.0
    %639 = vmatpush2.xpose.msra.mxu0 0.0
    %640 = vmatprep.subr.mxu0 0.0
    %641 = vmatpush2.xpose.msra.mxu0 0.0
    %642 = vmatprep.subr.mxu0 0.0
    %643 = vmatpush2.xpose.msra.mxu0 0.0
    %644 = vmatprep.mubr.f32.mxu0 %v112
    %645 = vmatmul.mubr.f32.gmra.mxu0 %v110
    %v646 = vpop.f32.mrf.mxu0
    %v647 = vadd.f32 %v577, %v646
    %v648 = vpop.f32.mrf.mxu0
    %649 = vdwg.mxu0
    %650 = vmatprep.subr.mxu0 0.0
    %651 = vmatpush1.xpose.msra.mxu0 0.0
    %652 = vmatprep.subr.mxu0 0.0
    %653 = vmatpush1.xpose.msra.mxu0 0.0
    %654 = vmatprep.subr.mxu0 0.0
    %655 = vmatpush1.xpose.msra.mxu0 0.0
    %656 = vmatprep.subr.mxu0 0.0
    %657 = vmatpush1.xpose.msra.mxu0 0.0
    %658 = vmatprep.subr.mxu0 0.0
    %659 = vmatpush1.xpose.msra.mxu0 0.0
    %660 = vmatprep.subr.mxu0 0.0
    %661 = vmatpush1.xpose.msra.mxu0 0.0
    %662 = vmatprep.subr.mxu0 0.0
    %663 = vmatpush1.xpose.msra.mxu0 0.0
    %664 = vmatprep.subr.mxu0 0.0
    %665 = vmatpush1.xpose.msra.mxu0 0.0
    %666 = vmatprep.subr.mxu0 0.0
    %667 = vmatpush1.xpose.msra.mxu0 0.0
    %668 = vmatprep.subr.mxu0 0.0
    %669 = vmatpush1.xpose.msra.mxu0 0.0
    %670 = vmatprep.subr.mxu0 0.0
    %671 = vmatpush1.xpose.msra.mxu0 0.0
    %672 = vmatprep.subr.mxu0 0.0
    %673 = vmatpush1.xpose.msra.mxu0 0.0
    %674 = vmatprep.subr.mxu0 0.0
    %675 = vmatpush1.xpose.msra.mxu0 0.0
    %676 = vmatprep.subr.mxu0 0.0
    %677 = vmatpush1.xpose.msra.mxu0 0.0
    %678 = vmatprep.subr.mxu0 0.0
    %679 = vmatpush1.xpose.msra.mxu0 0.0
    %680 = vmatprep.subr.mxu0 %v500
    %681 = vmatpush1.xpose.msra.mxu0 %v492
    %682 = vmatprep.subr.mxu0 0.0
    %683 = vmatpush2.xpose.msra.mxu0 0.0
    %684 = vmatprep.subr.mxu0 0.0
    %685 = vmatpush2.xpose.msra.mxu0 0.0
    %686 = vmatprep.subr.mxu0 0.0
    %687 = vmatpush2.xpose.msra.mxu0 0.0
    %688 = vmatprep.subr.mxu0 0.0
    %689 = vmatpush2.xpose.msra.mxu0 0.0
    %690 = vmatprep.subr.mxu0 0.0
    %691 = vmatpush2.xpose.msra.mxu0 0.0
    %692 = vmatprep.subr.mxu0 0.0
    %693 = vmatpush2.xpose.msra.mxu0 0.0
    %694 = vmatprep.subr.mxu0 0.0
    %695 = vmatpush2.xpose.msra.mxu0 0.0
    %696 = vmatprep.subr.mxu0 0.0
    %697 = vmatpush2.xpose.msra.mxu0 0.0
    %698 = vmatprep.subr.mxu0 0.0
    %699 = vmatpush2.xpose.msra.mxu0 0.0
    %700 = vmatprep.subr.mxu0 0.0
    %701 = vmatpush2.xpose.msra.mxu0 0.0
    %702 = vmatprep.subr.mxu0 0.0
    %703 = vmatpush2.xpose.msra.mxu0 0.0
    %704 = vmatprep.subr.mxu0 0.0
    %705 = vmatpush2.xpose.msra.mxu0 0.0
    %706 = vmatprep.subr.mxu0 0.0
    %707 = vmatpush2.xpose.msra.mxu0 0.0
    %708 = vmatprep.subr.mxu0 0.0
    %709 = vmatpush2.xpose.msra.mxu0 0.0
    %710 = vmatprep.subr.mxu0 0.0
    %711 = vmatpush2.xpose.msra.mxu0 0.0
    %712 = vmatprep.subr.mxu0 0.0
    %713 = vmatpush2.xpose.msra.mxu0 0.0
    %714 = vmatprep.mubr.f32.mxu0 %v128
    %715 = vmatmul.mubr.f32.gmra.mxu0 %v120
    %v716 = vpop.f32.mrf.mxu0
    %v717 = vadd.f32 %v647, %v716
    %v718 = vpop.f32.mrf.mxu0
    %719 = vdwg.mxu0
    %720 = vmatprep.subr.mxu0 0.0
    %721 = vmatpush1.xpose.msra.mxu0 0.0
    %722 = vmatprep.subr.mxu0 0.0
    %723 = vmatpush1.xpose.msra.mxu0 0.0
    %724 = vmatprep.subr.mxu0 0.0
    %725 = vmatpush1.xpose.msra.mxu0 0.0
    %726 = vmatprep.subr.mxu0 0.0
    %727 = vmatpush1.xpose.msra.mxu0 0.0
    %728 = vmatprep.subr.mxu0 0.0
    %729 = vmatpush1.xpose.msra.mxu0 0.0
    %730 = vmatprep.subr.mxu0 0.0
    %731 = vmatpush1.xpose.msra.mxu0 0.0
    %732 = vmatprep.subr.mxu0 0.0
    %733 = vmatpush1.xpose.msra.mxu0 0.0
    %734 = vmatprep.subr.mxu0 0.0
    %735 = vmatpush1.xpose.msra.mxu0 0.0
    %736 = vmatprep.subr.mxu0 0.0
    %737 = vmatpush1.xpose.msra.mxu0 0.0
    %738 = vmatprep.subr.mxu0 0.0
    %739 = vmatpush1.xpose.msra.mxu0 0.0
    %740 = vmatprep.subr.mxu0 0.0
    %741 = vmatpush1.xpose.msra.mxu0 0.0
    %742 = vmatprep.subr.mxu0 0.0
    %743 = vmatpush1.xpose.msra.mxu0 0.0
    %744 = vmatprep.subr.mxu0 0.0
    %745 = vmatpush1.xpose.msra.mxu0 0.0
    %746 = vmatprep.subr.mxu0 0.0
    %747 = vmatpush1.xpose.msra.mxu0 0.0
    %748 = vmatprep.subr.mxu0 0.0
    %749 = vmatpush1.xpose.msra.mxu0 0.0
    %750 = vmatprep.subr.mxu0 %v501
    %751 = vmatpush1.xpose.msra.mxu0 %v499
    %752 = vmatprep.subr.mxu0 0.0
    %753 = vmatpush2.xpose.msra.mxu0 0.0
    %754 = vmatprep.subr.mxu0 0.0
    %755 = vmatpush2.xpose.msra.mxu0 0.0
    %756 = vmatprep.subr.mxu0 0.0
    %757 = vmatpush2.xpose.msra.mxu0 0.0
    %758 = vmatprep.subr.mxu0 0.0
    %759 = vmatpush2.xpose.msra.mxu0 0.0
    %760 = vmatprep.subr.mxu0 0.0
    %761 = vmatpush2.xpose.msra.mxu0 0.0
    %762 = vmatprep.subr.mxu0 0.0
    %763 = vmatpush2.xpose.msra.mxu0 0.0
    %764 = vmatprep.subr.mxu0 0.0
    %765 = vmatpush2.xpose.msra.mxu0 0.0
    %766 = vmatprep.subr.mxu0 0.0
    %767 = vmatpush2.xpose.msra.mxu0 0.0
    %768 = vmatprep.subr.mxu0 0.0
    %769 = vmatpush2.xpose.msra.mxu0 0.0
    %770 = vmatprep.subr.mxu0 0.0
    %771 = vmatpush2.xpose.msra.mxu0 0.0
    %772 = vmatprep.subr.mxu0 0.0
    %773 = vmatpush2.xpose.msra.mxu0 0.0
    %774 = vmatprep.subr.mxu0 0.0
    %775 = vmatpush2.xpose.msra.mxu0 0.0
    %776 = vmatprep.subr.mxu0 0.0
    %777 = vmatpush2.xpose.msra.mxu0 0.0
    %778 = vmatprep.subr.mxu0 0.0
    %779 = vmatpush2.xpose.msra.mxu0 0.0
    %780 = vmatprep.subr.mxu0 0.0
    %781 = vmatpush2.xpose.msra.mxu0 0.0
    %782 = vmatprep.subr.mxu0 0.0
    %783 = vmatpush2.xpose.msra.mxu0 0.0
    %784 = vmatprep.mubr.f32.mxu0 %v129
    %785 = vmatmul.mubr.f32.gmra.mxu0 %v127
    %v786 = vpop.f32.mrf.mxu0
    %v787 = vadd.f32 %v717, %v786
    %v788 = vpop.f32.mrf.mxu0
    %789 = vdwg.mxu0
    %v790 = vadd.f32 %v465, %v787
    %791 = vst.msk [vmem:[#allocation9] sm:$0x3] %vm463, %v790
    %v792 = vld [vmem:[#allocation11] sm:$0x3]
    %793 = vmatprep.subr.mxu0 0.0
    %794 = vmatpush1.xpose.msra.mxu0 0.0
    %795 = vmatprep.subr.mxu0 0.0
    %796 = vmatpush1.xpose.msra.mxu0 0.0
    %797 = vmatprep.subr.mxu0 0.0
    %798 = vmatpush1.xpose.msra.mxu0 0.0
    %799 = vmatprep.subr.mxu0 0.0
    %800 = vmatpush1.xpose.msra.mxu0 0.0
    %801 = vmatprep.subr.mxu0 0.0
    %802 = vmatpush1.xpose.msra.mxu0 0.0
    %803 = vmatprep.subr.mxu0 0.0
    %804 = vmatpush1.xpose.msra.mxu0 0.0
    %805 = vmatprep.subr.mxu0 0.0
    %806 = vmatpush1.xpose.msra.mxu0 0.0
    %807 = vmatprep.subr.mxu0 0.0
    %808 = vmatpush1.xpose.msra.mxu0 0.0
    %809 = vmatprep.subr.mxu0 0.0
    %810 = vmatpush1.xpose.msra.mxu0 0.0
    %811 = vmatprep.subr.mxu0 0.0
    %812 = vmatpush1.xpose.msra.mxu0 0.0
    %813 = vmatprep.subr.mxu0 0.0
    %814 = vmatpush1.xpose.msra.mxu0 0.0
    %815 = vmatprep.subr.mxu0 0.0
    %816 = vmatpush1.xpose.msra.mxu0 0.0
    %817 = vmatprep.subr.mxu0 0.0
    %818 = vmatpush1.xpose.msra.mxu0 0.0
    %819 = vmatprep.subr.mxu0 0.0
    %820 = vmatpush1.xpose.msra.mxu0 0.0
    %821 = vmatprep.subr.mxu0 0.0
    %822 = vmatpush1.xpose.msra.mxu0 0.0
    %823 = vmatprep.subr.mxu0 %v483
    %824 = vmatpush1.xpose.msra.mxu0 %v475
    %825 = vmatprep.subr.mxu0 0.0
    %826 = vmatpush2.xpose.msra.mxu0 0.0
    %827 = vmatprep.subr.mxu0 0.0
    %828 = vmatpush2.xpose.msra.mxu0 0.0
    %829 = vmatprep.subr.mxu0 0.0
    %830 = vmatpush2.xpose.msra.mxu0 0.0
    %831 = vmatprep.subr.mxu0 0.0
    %832 = vmatpush2.xpose.msra.mxu0 0.0
    %833 = vmatprep.subr.mxu0 0.0
    %834 = vmatpush2.xpose.msra.mxu0 0.0
    %835 = vmatprep.subr.mxu0 0.0
    %836 = vmatpush2.xpose.msra.mxu0 0.0
    %837 = vmatprep.subr.mxu0 0.0
    %838 = vmatpush2.xpose.msra.mxu0 0.0
    %839 = vmatprep.subr.mxu0 0.0
    %840 = vmatpush2.xpose.msra.mxu0 0.0
    %841 = vmatprep.subr.mxu0 0.0
    %842 = vmatpush2.xpose.msra.mxu0 0.0
    %843 = vmatprep.subr.mxu0 0.0
    %844 = vmatpush2.xpose.msra.mxu0 0.0
    %845 = vmatprep.subr.mxu0 0.0
    %846 = vmatpush2.xpose.msra.mxu0 0.0
    %847 = vmatprep.subr.mxu0 0.0
    %848 = vmatpush2.xpose.msra.mxu0 0.0
    %849 = vmatprep.subr.mxu0 0.0
    %850 = vmatpush2.xpose.msra.mxu0 0.0
    %851 = vmatprep.subr.mxu0 0.0
    %852 = vmatpush2.xpose.msra.mxu0 0.0
    %853 = vmatprep.subr.mxu0 0.0
    %854 = vmatpush2.xpose.msra.mxu0 0.0
    %855 = vmatprep.subr.mxu0 0.0
    %856 = vmatpush2.xpose.msra.mxu0 0.0
    %857 = vmatprep.mubr.f32.mxu0 %v155
    %858 = vmatmul.mubr.f32.gmra.mxu0 %v147
    %v859 = vpop.f32.mrf.mxu0
    %v860 = vadd.f32 0.0, %v859
    %v861 = vpop.f32.mrf.mxu0
    %862 = vdwg.mxu0
    %863 = vmatprep.subr.mxu0 0.0
    %864 = vmatpush1.xpose.msra.mxu0 0.0
    %865 = vmatprep.subr.mxu0 0.0
    %866 = vmatpush1.xpose.msra.mxu0 0.0
    %867 = vmatprep.subr.mxu0 0.0
    %868 = vmatpush1.xpose.msra.mxu0 0.0
    %869 = vmatprep.subr.mxu0 0.0
    %870 = vmatpush1.xpose.msra.mxu0 0.0
    %871 = vmatprep.subr.mxu0 0.0
    %872 = vmatpush1.xpose.msra.mxu0 0.0
    %873 = vmatprep.subr.mxu0 0.0
    %874 = vmatpush1.xpose.msra.mxu0 0.0
    %875 = vmatprep.subr.mxu0 0.0
    %876 = vmatpush1.xpose.msra.mxu0 0.0
    %877 = vmatprep.subr.mxu0 0.0
    %878 = vmatpush1.xpose.msra.mxu0 0.0
    %879 = vmatprep.subr.mxu0 0.0
    %880 = vmatpush1.xpose.msra.mxu0 0.0
    %881 = vmatprep.subr.mxu0 0.0
    %882 = vmatpush1.xpose.msra.mxu0 0.0
    %883 = vmatprep.subr.mxu0 0.0
    %884 = vmatpush1.xpose.msra.mxu0 0.0
    %885 = vmatprep.subr.mxu0 0.0
    %886 = vmatpush1.xpose.msra.mxu0 0.0
    %887 = vmatprep.subr.mxu0 0.0
    %888 = vmatpush1.xpose.msra.mxu0 0.0
    %889 = vmatprep.subr.mxu0 0.0
    %890 = vmatpush1.xpose.msra.mxu0 0.0
    %891 = vmatprep.subr.mxu0 0.0
    %892 = vmatpush1.xpose.msra.mxu0 0.0
    %893 = vmatprep.subr.mxu0 %v484
    %894 = vmatpush1.xpose.msra.mxu0 %v482
    %895 = vmatprep.subr.mxu0 0.0
    %896 = vmatpush2.xpose.msra.mxu0 0.0
    %897 = vmatprep.subr.mxu0 0.0
    %898 = vmatpush2.xpose.msra.mxu0 0.0
    %899 = vmatprep.subr.mxu0 0.0
    %900 = vmatpush2.xpose.msra.mxu0 0.0
    %901 = vmatprep.subr.mxu0 0.0
    %902 = vmatpush2.xpose.msra.mxu0 0.0
    %903 = vmatprep.subr.mxu0 0.0
    %904 = vmatpush2.xpose.msra.mxu0 0.0
    %905 = vmatprep.subr.mxu0 0.0
    %906 = vmatpush2.xpose.msra.mxu0 0.0
    %907 = vmatprep.subr.mxu0 0.0
    %908 = vmatpush2.xpose.msra.mxu0 0.0
    %909 = vmatprep.subr.mxu0 0.0
    %910 = vmatpush2.xpose.msra.mxu0 0.0
    %911 = vmatprep.subr.mxu0 0.0
    %912 = vmatpush2.xpose.msra.mxu0 0.0
    %913 = vmatprep.subr.mxu0 0.0
    %914 = vmatpush2.xpose.msra.mxu0 0.0
    %915 = vmatprep.subr.mxu0 0.0
    %916 = vmatpush2.xpose.msra.mxu0 0.0
    %917 = vmatprep.subr.mxu0 0.0
    %918 = vmatpush2.xpose.msra.mxu0 0.0
    %919 = vmatprep.subr.mxu0 0.0
    %920 = vmatpush2.xpose.msra.mxu0 0.0
    %921 = vmatprep.subr.mxu0 0.0
    %922 = vmatpush2.xpose.msra.mxu0 0.0
    %923 = vmatprep.subr.mxu0 0.0
    %924 = vmatpush2.xpose.msra.mxu0 0.0
    %925 = vmatprep.subr.mxu0 0.0
    %926 = vmatpush2.xpose.msra.mxu0 0.0
    %927 = vmatprep.mubr.f32.mxu0 %v156
    %928 = vmatmul.mubr.f32.gmra.mxu0 %v154
    %v929 = vpop.f32.mrf.mxu0
    %v930 = vadd.f32 %v860, %v929
    %v931 = vpop.f32.mrf.mxu0
    %932 = vdwg.mxu0
    %933 = vmatprep.subr.mxu0 0.0
    %934 = vmatpush1.xpose.msra.mxu0 0.0
    %935 = vmatprep.subr.mxu0 0.0
    %936 = vmatpush1.xpose.msra.mxu0 0.0
    %937 = vmatprep.subr.mxu0 0.0
    %938 = vmatpush1.xpose.msra.mxu0 0.0
    %939 = vmatprep.subr.mxu0 0.0
    %940 = vmatpush1.xpose.msra.mxu0 0.0
    %941 = vmatprep.subr.mxu0 0.0
    %942 = vmatpush1.xpose.msra.mxu0 0.0
    %943 = vmatprep.subr.mxu0 0.0
    %944 = vmatpush1.xpose.msra.mxu0 0.0
    %945 = vmatprep.subr.mxu0 0.0
    %946 = vmatpush1.xpose.msra.mxu0 0.0
    %947 = vmatprep.subr.mxu0 0.0
    %948 = vmatpush1.xpose.msra.mxu0 0.0
    %949 = vmatprep.subr.mxu0 0.0
    %950 = vmatpush1.xpose.msra.mxu0 0.0
    %951 = vmatprep.subr.mxu0 0.0
    %952 = vmatpush1.xpose.msra.mxu0 0.0
    %953 = vmatprep.subr.mxu0 0.0
    %954 = vmatpush1.xpose.msra.mxu0 0.0
    %955 = vmatprep.subr.mxu0 0.0
    %956 = vmatpush1.xpose.msra.mxu0 0.0
    %957 = vmatprep.subr.mxu0 0.0
    %958 = vmatpush1.xpose.msra.mxu0 0.0
    %959 = vmatprep.subr.mxu0 0.0
    %960 = vmatpush1.xpose.msra.mxu0 0.0
    %961 = vmatprep.subr.mxu0 0.0
    %962 = vmatpush1.xpose.msra.mxu0 0.0
    %963 = vmatprep.subr.mxu0 %v500
    %964 = vmatpush1.xpose.msra.mxu0 %v492
    %965 = vmatprep.subr.mxu0 0.0
    %966 = vmatpush2.xpose.msra.mxu0 0.0
    %967 = vmatprep.subr.mxu0 0.0
    %968 = vmatpush2.xpose.msra.mxu0 0.0
    %969 = vmatprep.subr.mxu0 0.0
    %970 = vmatpush2.xpose.msra.mxu0 0.0
    %971 = vmatprep.subr.mxu0 0.0
    %972 = vmatpush2.xpose.msra.mxu0 0.0
    %973 = vmatprep.subr.mxu0 0.0
    %974 = vmatpush2.xpose.msra.mxu0 0.0
    %975 = vmatprep.subr.mxu0 0.0
    %976 = vmatpush2.xpose.msra.mxu0 0.0
    %977 = vmatprep.subr.mxu0 0.0
    %978 = vmatpush2.xpose.msra.mxu0 0.0
    %979 = vmatprep.subr.mxu0 0.0
    %980 = vmatpush2.xpose.msra.mxu0 0.0
    %981 = vmatprep.subr.mxu0 0.0
    %982 = vmatpush2.xpose.msra.mxu0 0.0
    %983 = vmatprep.subr.mxu0 0.0
    %984 = vmatpush2.xpose.msra.mxu0 0.0
    %985 = vmatprep.subr.mxu0 0.0
    %986 = vmatpush2.xpose.msra.mxu0 0.0
    %987 = vmatprep.subr.mxu0 0.0
    %988 = vmatpush2.xpose.msra.mxu0 0.0
    %989 = vmatprep.subr.mxu0 0.0
    %990 = vmatpush2.xpose.msra.mxu0 0.0
    %991 = vmatprep.subr.mxu0 0.0
    %992 = vmatpush2.xpose.msra.mxu0 0.0
    %993 = vmatprep.subr.mxu0 0.0
    %994 = vmatpush2.xpose.msra.mxu0 0.0
    %995 = vmatprep.subr.mxu0 0.0
    %996 = vmatpush2.xpose.msra.mxu0 0.0
    %997 = vmatprep.mubr.f32.mxu0 %v172
    %998 = vmatmul.mubr.f32.gmra.mxu0 %v164
    %v999 = vpop.f32.mrf.mxu0
    %v1000 = vadd.f32 %v930, %v999
    %v1001 = vpop.f32.mrf.mxu0
    %1002 = vdwg.mxu0
    %1003 = vmatprep.subr.mxu0 0.0
    %1004 = vmatpush1.xpose.msra.mxu0 0.0
    %1005 = vmatprep.subr.mxu0 0.0
    %1006 = vmatpush1.xpose.msra.mxu0 0.0
    %1007 = vmatprep.subr.mxu0 0.0
    %1008 = vmatpush1.xpose.msra.mxu0 0.0
    %1009 = vmatprep.subr.mxu0 0.0
    %1010 = vmatpush1.xpose.msra.mxu0 0.0
    %1011 = vmatprep.subr.mxu0 0.0
    %1012 = vmatpush1.xpose.msra.mxu0 0.0
    %1013 = vmatprep.subr.mxu0 0.0
    %1014 = vmatpush1.xpose.msra.mxu0 0.0
    %1015 = vmatprep.subr.mxu0 0.0
    %1016 = vmatpush1.xpose.msra.mxu0 0.0
    %1017 = vmatprep.subr.mxu0 0.0
    %1018 = vmatpush1.xpose.msra.mxu0 0.0
    %1019 = vmatprep.subr.mxu0 0.0
    %1020 = vmatpush1.xpose.msra.mxu0 0.0
    %1021 = vmatprep.subr.mxu0 0.0
    %1022 = vmatpush1.xpose.msra.mxu0 0.0
    %1023 = vmatprep.subr.mxu0 0.0
    %1024 = vmatpush1.xpose.msra.mxu0 0.0
    %1025 = vmatprep.subr.mxu0 0.0
    %1026 = vmatpush1.xpose.msra.mxu0 0.0
    %1027 = vmatprep.subr.mxu0 0.0
    %1028 = vmatpush1.xpose.msra.mxu0 0.0
    %1029 = vmatprep.subr.mxu0 0.0
    %1030 = vmatpush1.xpose.msra.mxu0 0.0
    %1031 = vmatprep.subr.mxu0 0.0
    %1032 = vmatpush1.xpose.msra.mxu0 0.0
    %1033 = vmatprep.subr.mxu0 %v501
    %1034 = vmatpush1.xpose.msra.mxu0 %v499
    %1035 = vmatprep.subr.mxu0 0.0
    %1036 = vmatpush2.xpose.msra.mxu0 0.0
    %1037 = vmatprep.subr.mxu0 0.0
    %1038 = vmatpush2.xpose.msra.mxu0 0.0
    %1039 = vmatprep.subr.mxu0 0.0
    %1040 = vmatpush2.xpose.msra.mxu0 0.0
    %1041 = vmatprep.subr.mxu0 0.0
    %1042 = vmatpush2.xpose.msra.mxu0 0.0
    %1043 = vmatprep.subr.mxu0 0.0
    %1044 = vmatpush2.xpose.msra.mxu0 0.0
    %1045 = vmatprep.subr.mxu0 0.0
    %1046 = vmatpush2.xpose.msra.mxu0 0.0
    %1047 = vmatprep.subr.mxu0 0.0
    %1048 = vmatpush2.xpose.msra.mxu0 0.0
    %1049 = vmatprep.subr.mxu0 0.0
    %1050 = vmatpush2.xpose.msra.mxu0 0.0
    %1051 = vmatprep.subr.mxu0 0.0
    %1052 = vmatpush2.xpose.msra.mxu0 0.0
    %1053 = vmatprep.subr.mxu0 0.0
    %1054 = vmatpush2.xpose.msra.mxu0 0.0
    %1055 = vmatprep.subr.mxu0 0.0
    %1056 = vmatpush2.xpose.msra.mxu0 0.0
    %1057 = vmatprep.subr.mxu0 0.0
    %1058 = vmatpush2.xpose.msra.mxu0 0.0
    %1059 = vmatprep.subr.mxu0 0.0
    %1060 = vmatpush2.xpose.msra.mxu0 0.0
    %1061 = vmatprep.subr.mxu0 0.0
    %1062 = vmatpush2.xpose.msra.mxu0 0.0
    %1063 = vmatprep.subr.mxu0 0.0
    %1064 = vmatpush2.xpose.msra.mxu0 0.0
    %1065 = vmatprep.subr.mxu0 0.0
    %1066 = vmatpush2.xpose.msra.mxu0 0.0
    %1067 = vmatprep.mubr.f32.mxu0 %v173
    %1068 = vmatmul.mubr.f32.gmra.mxu0 %v171
    %v1069 = vpop.f32.mrf.mxu0
    %v1070 = vadd.f32 %v1000, %v1069
    %v1071 = vpop.f32.mrf.mxu0
    %1072 = vdwg.mxu0
    %v1073 = vadd.f32 %v792, %v1070
    %1074 = vst.msk [vmem:[#allocation11] sm:$0x3] %vm463, %v1073
    %v1075 = vld [vmem:[%s6] sm:$0x3]
    %v1076 = vmul.f32 %v87, %v87
    %v1077 = vmul.f32 %v88, %v88
    %v1080 = vcombine.high %v1076, %v1076
    %v1082 = vunpack.c.l.s4 1983009808
    %v1083 = vunpack.c.0.s8 %v1082
    %v1084 = vlaneseq
    %v1085 = vshrl.u32 %v1084, 7
    %v1086 = vsub.s32 %v1083, %v1085
    %v1087 = vrot.slane %v1076, %v1086
    %v1089 = vunpack.c.l.s4 1983009808
    %v1090 = vunpack.c.0.s8 %v1089
    %v1091 = vlaneseq
    %v1092 = vshrl.u32 %v1091, 7
    %v1093 = vsub.s32 %v1090, %v1092
    %v1094 = vrot.slane %v1080, %v1093
    %v1095 = vcombine.high %v1087, %v1087
    %v1096 = vcombine.high %v1094, %v1094
    %v1097 = vcombine.high %v1077, %v1077
    %v1099 = vunpack.c.l.s4 1983009808
    %v1100 = vunpack.c.0.s8 %v1099
    %v1101 = vlaneseq
    %v1102 = vshrl.u32 %v1101, 7
    %v1103 = vsub.s32 %v1100, %v1102
    %v1104 = vrot.slane %v1077, %v1103
    %v1106 = vunpack.c.l.s4 1983009808
    %v1107 = vunpack.c.0.s8 %v1106
    %v1108 = vlaneseq
    %v1109 = vshrl.u32 %v1108, 7
    %v1110 = vsub.s32 %v1107, %v1109
    %v1111 = vrot.slane %v1097, %v1110
    %v1112 = vcombine.high %v1104, %v1104
    %v1113 = vcombine.high %v1111, %v1111
    %vm1122 = vcmask 1041408
    %v1123 = vsel %vm1122, %v1087, 0.0
    %v1124 = vsel %vm1122, %v1095, 0.0
    %v1125 = vadd.f32 %v1123, %v1124
    %v1126 = vsel %vm1122, %v1094, 0.0
    %v1127 = vadd.f32 %v1125, %v1126
    %v1128 = vsel %vm1122, %v1096, 0.0
    %v1129 = vadd.f32 %v1127, %v1128
    %v1130 = vsel %vm1122, %v1104, 0.0
    %v1131 = vadd.f32 %v1129, %v1130
    %v1132 = vsel %vm1122, %v1112, 0.0
    %v1133 = vadd.f32 %v1131, %v1132
    %v1134 = vsel %vm1122, %v1111, 0.0
    %v1135 = vadd.f32 %v1133, %v1134
    %v1136 = vsel %vm1122, %v1113, 0.0
    %v1137 = vadd.f32 %v1135, %v1136
    %1138 = vadd.xlane.f32.xlu0 %v1137
    %v1139 = vpop.xlane.xlu0 %1138
    %v1140 = vadd.f32 %v1075, %v1139
    %vm1141 = vcmask 1024
    %1142 = vst.msk [vmem:[%s6] sm:$0x3] %vm1141, %v1140
    %v1143 = vld [vmem:[%s7] sm:$0x3]
    %v1144 = vmul.f32 %v89, %v89
    %v1145 = vmul.f32 %v90, %v90
    %v1148 = vcombine.high %v1144, %v1144
    %v1150 = vunpack.c.l.s4 1983009808
    %v1151 = vunpack.c.0.s8 %v1150
    %v1152 = vlaneseq
    %v1153 = vshrl.u32 %v1152, 7
    %v1154 = vsub.s32 %v1151, %v1153
    %v1155 = vrot.slane %v1144, %v1154
    %v1157 = vunpack.c.l.s4 1983009808
    %v1158 = vunpack.c.0.s8 %v1157
    %v1159 = vlaneseq
    %v1160 = vshrl.u32 %v1159, 7
    %v1161 = vsub.s32 %v1158, %v1160
    %v1162 = vrot.slane %v1148, %v1161
    %v1163 = vcombine.high %v1155, %v1155
    %v1164 = vcombine.high %v1162, %v1162
    %v1165 = vcombine.high %v1145, %v1145
    %v1167 = vunpack.c.l.s4 1983009808
    %v1168 = vunpack.c.0.s8 %v1167
    %v1169 = vlaneseq
    %v1170 = vshrl.u32 %v1169, 7
    %v1171 = vsub.s32 %v1168, %v1170
    %v1172 = vrot.slane %v1145, %v1171
    %v1174 = vunpack.c.l.s4 1983009808
    %v1175 = vunpack.c.0.s8 %v1174
    %v1176 = vlaneseq
    %v1177 = vshrl.u32 %v1176, 7
    %v1178 = vsub.s32 %v1175, %v1177
    %v1179 = vrot.slane %v1165, %v1178
    %v1180 = vcombine.high %v1172, %v1172
    %v1181 = vcombine.high %v1179, %v1179
    %v1190 = vsel %vm1122, %v1155, 0.0
    %v1191 = vsel %vm1122, %v1163, 0.0
    %v1192 = vadd.f32 %v1190, %v1191
    %v1193 = vsel %vm1122, %v1162, 0.0
    %v1194 = vadd.f32 %v1192, %v1193
    %v1195 = vsel %vm1122, %v1164, 0.0
    %v1196 = vadd.f32 %v1194, %v1195
    %v1197 = vsel %vm1122, %v1172, 0.0
    %v1198 = vadd.f32 %v1196, %v1197
    %v1199 = vsel %vm1122, %v1180, 0.0
    %v1200 = vadd.f32 %v1198, %v1199
    %v1201 = vsel %vm1122, %v1179, 0.0
    %v1202 = vadd.f32 %v1200, %v1201
    %v1203 = vsel %vm1122, %v1181, 0.0
    %v1204 = vadd.f32 %v1202, %v1203
    %1205 = vadd.xlane.f32.xlu0 %v1204
    %v1206 = vpop.xlane.xlu0 %1205
    %v1207 = vadd.f32 %v1143, %v1206
    %1208 = vst.msk [vmem:[%s7] sm:$0x3] %vm1141, %v1207
    %v1209 = vld [vmem:[%s8] sm:$0x3]
    %v1210 = vmul.f32 %v91, %v91
    %v1211 = vmul.f32 %v92, %v92
    %v1214 = vcombine.high %v1210, %v1210
    %v1216 = vunpack.c.l.s4 1983009808
    %v1217 = vunpack.c.0.s8 %v1216
    %v1218 = vlaneseq
    %v1219 = vshrl.u32 %v1218, 7
    %v1220 = vsub.s32 %v1217, %v1219
    %v1221 = vrot.slane %v1210, %v1220
    %v1223 = vunpack.c.l.s4 1983009808
    %v1224 = vunpack.c.0.s8 %v1223
    %v1225 = vlaneseq
    %v1226 = vshrl.u32 %v1225, 7
    %v1227 = vsub.s32 %v1224, %v1226
    %v1228 = vrot.slane %v1214, %v1227
    %v1229 = vcombine.high %v1221, %v1221
    %v1230 = vcombine.high %v1228, %v1228
    %v1231 = vcombine.high %v1211, %v1211
    %v1233 = vunpack.c.l.s4 1983009808
    %v1234 = vunpack.c.0.s8 %v1233
    %v1235 = vlaneseq
    %v1236 = vshrl.u32 %v1235, 7
    %v1237 = vsub.s32 %v1234, %v1236
    %v1238 = vrot.slane %v1211, %v1237
    %v1240 = vunpack.c.l.s4 1983009808
    %v1241 = vunpack.c.0.s8 %v1240
    %v1242 = vlaneseq
    %v1243 = vshrl.u32 %v1242, 7
    %v1244 = vsub.s32 %v1241, %v1243
    %v1245 = vrot.slane %v1231, %v1244
    %v1246 = vcombine.high %v1238, %v1238
    %v1247 = vcombine.high %v1245, %v1245
    %v1256 = vsel %vm1122, %v1221, 0.0
    %v1257 = vsel %vm1122, %v1229, 0.0
    %v1258 = vadd.f32 %v1256, %v1257
    %v1259 = vsel %vm1122, %v1228, 0.0
    %v1260 = vadd.f32 %v1258, %v1259
    %v1261 = vsel %vm1122, %v1230, 0.0
    %v1262 = vadd.f32 %v1260, %v1261
    %v1263 = vsel %vm1122, %v1238, 0.0
    %v1264 = vadd.f32 %v1262, %v1263
    %v1265 = vsel %vm1122, %v1246, 0.0
    %v1266 = vadd.f32 %v1264, %v1265
    %v1267 = vsel %vm1122, %v1245, 0.0
    %v1268 = vadd.f32 %v1266, %v1267
    %v1269 = vsel %vm1122, %v1247, 0.0
    %v1270 = vadd.f32 %v1268, %v1269
    %1271 = vadd.xlane.f32.xlu0 %v1270
    %v1272 = vpop.xlane.xlu0 %1271
    %v1273 = vadd.f32 %v1209, %v1272
    %1274 = vst.msk [vmem:[%s8] sm:$0x3] %vm1141, %v1273
    // Predicated region
    $region30: #{tpu_custom_call.1} parent=1 // pred_check
      _
    $region31: #{tpu_custom_call.1} parent=1 // pred_check_branch
      %1276 = sbr.rel (0) target = $region33
    $region32: #{tpu_custom_call.1} parent=1 // pred_region
      %s1278 = ssub.s32 32, 32
      %1279 = vsyncadd [#allocation4], %s1278
      %s1281 = sshll.u32 [#allocation8], 4
      %s1282 = int_to_ptr.vmem [resolvable:$true] %s1281
      %1284 = dma.vmem_to_hbm [thread:$0]  %s1282, 32, %s3, [#allocation4]
    $region33: #{tpu_custom_call.1} parent=1 // pred_fallthru
      _
    // Predicated region
    $region34: #{tpu_custom_call.1} parent=1 // pred_check
      _
    $region35: #{tpu_custom_call.1} parent=1 // pred_check_branch
      %1286 = sbr.rel (0) target = $region37
    $region36: #{tpu_custom_call.1} parent=1 // pred_region
      %s1288 = ssub.s32 32, 32
      %1289 = vsyncadd [#allocation10], %s1288
      %s1291 = sshll.u32 [#allocation9], 4
      %s1292 = int_to_ptr.vmem [resolvable:$true] %s1291
      %1294 = dma.vmem_to_hbm [thread:$0]  %s1292, 32, %s4, [#allocation10]
    $region37: #{tpu_custom_call.1} parent=1 // pred_fallthru
      _
    // Predicated region
    $region38: #{tpu_custom_call.1} parent=1 // pred_check
      _
    $region39: #{tpu_custom_call.1} parent=1 // pred_check_branch
      %1296 = sbr.rel (0) target = $region41
    $region40: #{tpu_custom_call.1} parent=1 // pred_region
      %s1298 = ssub.s32 32, 32
      %1299 = vsyncadd [#allocation10], %s1298
      %s1301 = sshll.u32 [#allocation11], 4
      %s1302 = int_to_ptr.vmem [resolvable:$true] %s1301
      %1304 = dma.vmem_to_hbm [thread:$0]  %s1302, 32, %s5, [#allocation10]
    $region41: #{tpu_custom_call.1} parent=1 // pred_fallthru
      _
    // Predicated region
    $region42: #{tpu_custom_call.1} parent=1 // pred_check
      _
    $region43: #{tpu_custom_call.1} parent=1 // pred_check_branch
      %1306 = sbr.rel (0) target = $region45
    $region44: #{tpu_custom_call.1} parent=1 // pred_region
      _
    $region45: #{tpu_custom_call.1} parent=1 // pred_fallthru
      _
    // Predicated region
    $region46: #{tpu_custom_call.1} parent=1 // pred_check
      _
    $region47: #{tpu_custom_call.1} parent=1 // pred_check_branch
      %1308 = sbr.rel (0) target = $region49
    $region48: #{tpu_custom_call.1} parent=1 // pred_region
      _
    $region49: #{tpu_custom_call.1} parent=1 // pred_fallthru
      _
    // Predicated region
    $region50: #{tpu_custom_call.1} parent=1 // pred_check
      _
    $region51: #{tpu_custom_call.1} parent=1 // pred_check_branch
      %1310 = sbr.rel (0) target = $region53
    $region52: #{tpu_custom_call.1} parent=1 // pred_region
      _
    $region53: #{tpu_custom_call.1} parent=1 // pred_fallthru
      _
    // Predicated region
    $region54: #{tpu_custom_call.1} parent=1 // pred_check
      _
    $region55: #{tpu_custom_call.1} parent=1 // pred_check_branch
      %1312 = sbr.rel (0) target = $region57
    $region56: #{tpu_custom_call.1} parent=1 // pred_region
      %1313 = dma.done [#allocation4], 32
    $region57: #{tpu_custom_call.1} parent=1 // pred_fallthru
      _
    // Predicated region
    $region58: #{tpu_custom_call.1} parent=1 // pred_check
      _
    $region59: #{tpu_custom_call.1} parent=1 // pred_check_branch
      %1315 = sbr.rel (0) target = $region61
    $region60: #{tpu_custom_call.1} parent=1 // pred_region
      %1316 = dma.done [#allocation10], 32
    $region61: #{tpu_custom_call.1} parent=1 // pred_fallthru
      _
    // Predicated region
    $region62: #{tpu_custom_call.1} parent=1 // pred_check
      _
    $region63: #{tpu_custom_call.1} parent=1 // pred_check_branch
      %1318 = sbr.rel (0) target = $region65
    $region64: #{tpu_custom_call.1} parent=1 // pred_region
      %1319 = dma.done [#allocation10], 32
    $region65: #{tpu_custom_call.1} parent=1 // pred_fallthru
      _
    // Predicated region
    $region66: #{tpu_custom_call.1} parent=1 // pred_check
      _
    $region67: #{tpu_custom_call.1} parent=1 // pred_check_branch
      %1321 = sbr.rel (0) target = $region69
    $region68: #{tpu_custom_call.1} parent=1 // pred_region
      _
    $region69: #{tpu_custom_call.1} parent=1 // pred_fallthru
      _
    // Predicated region
    $region70: #{tpu_custom_call.1} parent=1 // pred_check
      _
    $region71: #{tpu_custom_call.1} parent=1 // pred_check_branch
      %1323 = sbr.rel (0) target = $region73
    $region72: #{tpu_custom_call.1} parent=1 // pred_region
      _
    $region73: #{tpu_custom_call.1} parent=1 // pred_fallthru
      _
    // Predicated region
    $region74: #{tpu_custom_call.1} parent=1 // pred_check
      _
    $region75: #{tpu_custom_call.1} parent=1 // pred_check_branch
      %1325 = sbr.rel (0) target = $region77
    $region76: #{tpu_custom_call.1} parent=1 // pred_region
      _
    $region77: #{tpu_custom_call.1} parent=1 // pred_fallthru
      _
    %1326 = vsyncpa [#allocation3], 1
    %1327 = vsyncpa [#allocation6], 1
    %1328 = vsyncpa [#allocation4], 1
    %1329 = vsyncpa [#allocation10], 1

</llo_original>
